<compile_context>
chip_gen: v7x
topology: tpu7x:2x2x1
jax: 0.10.0
libtpu: 0.0.40
codegen_flags: <defaults>
</compile_context>

<pallas_src>
import functools

import jax
import jax.numpy as jnp
from jax.experimental import pallas as pl
from jax.experimental.pallas import tpu as pltpu


def _xc_attention_kernel(x_ref, wqkv_ref, wproj_ref, bias_ref, temp_ref,
                         o_ref, y_ref, *, num_heads):
    f32 = jnp.float32
    bf16 = jnp.bfloat16

    E = wproj_ref.shape[0]
    e = E // num_heads

    x = x_ref[0]                                   # (S, E)  bf16, one batch item
    w_all = wqkv_ref[...]                          # (3E, E) bf16, rows ordered (n, h, e)

    # Fused QKV projection, channel-major result (already the q.transpose(-2,-1)
    # layout XCiT wants): qkv[row, s].
    qkv = jax.lax.dot_general(w_all, x, (((1,), (1,)), ((), ())),
                              preferred_element_type=f32)        # (3E, S) f32

    q_all = qkv[0 * E:1 * E]                       # (E, S)
    k_all = qkv[1 * E:2 * E]                       # (E, S)
    v_all = qkv[2 * E:3 * E]                       # (E, S)

    # F.normalize(dim=-1) over the sequence axis, vectorized over all heads:
    # x / max(||x||, eps)  ==  x * rsqrt(max(sum(x^2), eps^2)),  eps = 1e-12.
    eps2 = 1e-24
    qn = q_all * jax.lax.rsqrt(
        jnp.maximum(jnp.sum(q_all * q_all, axis=-1, keepdims=True), eps2))
    kn = k_all * jax.lax.rsqrt(
        jnp.maximum(jnp.sum(k_all * k_all, axis=-1, keepdims=True), eps2))

    # Per-head channel attention; head h's (e, S) value mix lands in rows
    # [h*e, (h+1)*e) of the resident scratch, matching the 'b n q s -> b s (n q)'
    # channel order expected by the output projection.
    for hd in range(num_heads):
        lo = hd * e
        q_h = qn[lo:lo + e].astype(bf16)           # (e, S)
        k_h = kn[lo:lo + e].astype(bf16)           # (e, S)
        v_h = v_all[lo:lo + e].astype(bf16)        # (e, S)

        attn = jax.lax.dot_general(q_h, k_h, (((1,), (1,)), ((), ())),
                                   preferred_element_type=f32)   # (e, e)
        attn = jax.nn.softmax(attn * temp_ref[hd], axis=-1)
        y_ref[lo:lo + e, :] = jnp.dot(attn.astype(bf16), v_h,
                                      preferred_element_type=f32)

    # Single full-width output projection, written directly in (S, E) layout:
    # out[s, eo] = sum_ei y[ei, s] * Wproj[ei, eo]  (+ bias).
    out = jax.lax.dot_general(y_ref[...], wproj_ref[...],
                              (((0,), (0,)), ((), ())),
                              preferred_element_type=f32)        # (S, E)
    o_ref[0] = (out + bias_ref[...]).astype(o_ref.dtype)


def xc_attention(x, w_qkv, temperature, w_proj, b_proj, num_heads):
    """XCAttention forward.

    x:            (B, S, E)
    w_qkv:        (E, 3E)   with qkv = x @ w_qkv (columns ordered (n=3, h, e))
    temperature:  (num_heads,) or (num_heads, 1, 1)
    w_proj:       (E, E)    with out = y @ w_proj + b_proj
    b_proj:       (E,)
    returns       (B, S, E)
    """
    B, S, E = x.shape
    h = num_heads
    e = E // h
    assert e * h == E

    bf16 = jnp.bfloat16
    x_in = x.astype(bf16)                                        # (B, S, E)
    # (3E, E): row n*E + h*e + c holds the weight vector producing that qkv channel.
    w_all = jnp.transpose(w_qkv, (1, 0)).astype(bf16)            # (3E, E)
    w_p = w_proj.astype(jnp.float32)                             # (E_in, E_out)
    bias = b_proj.reshape(1, E).astype(jnp.float32)              # (1, E)
    temp = temperature.reshape(h).astype(jnp.float32)            # (h,)

    kernel = functools.partial(_xc_attention_kernel, num_heads=h)

    grid_spec = pltpu.PrefetchScalarGridSpec(
        num_scalar_prefetch=0,
        grid=(B,),
        in_specs=[
            pl.BlockSpec((1, S, E), lambda b: (b, 0, 0)),        # x (per batch item)
            pl.BlockSpec((3 * E, E), lambda b: (0, 0)),          # fused qkv weights
            pl.BlockSpec((E, E), lambda b: (0, 0)),              # proj weights
            pl.BlockSpec((1, E), lambda b: (0, 0)),              # proj bias
            pl.BlockSpec(memory_space=pltpu.MemorySpace.SMEM),   # temperature (scalars)
        ],
        out_specs=pl.BlockSpec((1, S, E), lambda b: (b, 0, 0)),
        scratch_shapes=[pltpu.VMEM((E, S), jnp.float32)],        # per-head value mix
    )

    return pl.pallas_call(
        kernel,
        out_shape=jax.ShapeDtypeStruct((B, S, E), x.dtype),
        grid_spec=grid_spec,
        compiler_params=pltpu.CompilerParams(
            dimension_semantics=("parallel",),
            vmem_limit_bytes=32 * 1024 * 1024),
    )(x_in, w_all, w_p, bias, temp)


def _reference(x, w_qkv, temperature, w_proj, b_proj, num_heads):
    """Plain-JAX transcription of the PyTorch forward (for verification)."""
    B, S, E = x.shape
    h = num_heads
    e = E // h
    qkv = x @ w_qkv                                              # (B, S, 3E)
    qkv = qkv.reshape(B, S, 3, h, e).transpose(2, 0, 3, 1, 4)    # (3, B, h, S, e)
    q, k, v = qkv[0], qkv[1], qkv[2]
    q = q.transpose(0, 1, 3, 2)                                  # (B, h, e, S)
    k = k.transpose(0, 1, 3, 2)
    v = v.transpose(0, 1, 3, 2)
    qn = q / jnp.maximum(jnp.linalg.norm(q, axis=-1, keepdims=True), 1e-12)
    kn = k / jnp.maximum(jnp.linalg.norm(k, axis=-1, keepdims=True), 1e-12)
    attn = jnp.einsum('bhqs,bhks->bhqk', qn, kn) * temperature.reshape(1, h, 1, 1)
    attn = jax.nn.softmax(attn, axis=-1)
    y = jnp.einsum('bhqk,bhks->bhqs', attn, v)                   # (B, h, e, S)
    y = y.transpose(0, 3, 1, 2).reshape(B, S, E)                 # b s (h e)
    return y @ w_proj + b_proj


if __name__ == "__main__":
    B, S, E, H = 2, 16, 64, 8
    key = jax.random.PRNGKey(0)
    k1, k2, k3, k4 = jax.random.split(key, 4)

    x = jax.random.normal(k1, (B, S, E), dtype=jnp.float32)
    # Shapes from XCAttention.__init__:
    #   qkv:  Linear(E, 3E, bias=False) -> stored as (E, 3E) for y = x @ W
    #   proj: Linear(E, E)              -> stored as (E, E)  for y = x @ W + b
    #   temperature: (num_heads, 1, 1)  -> flat (H,)
    w_qkv = jax.random.normal(k2, (E, 3 * E), dtype=jnp.float32) * 0.05
    w_proj = jax.random.normal(k3, (E, E), dtype=jnp.float32) * 0.05
    b_proj = jax.random.normal(k4, (E,), dtype=jnp.float32) * 0.05
    temperature = 1.0 + 0.1 * jnp.arange(H, dtype=jnp.float32)

    out = jax.block_until_ready(
        xc_attention(x, w_qkv, temperature, w_proj, b_proj, H))

    ref = _reference(x, w_qkv, temperature, w_proj, b_proj, H)
    max_err = jnp.max(jnp.abs(out - ref))
    # bf16 matmul operands (f32 accumulation) -> relaxed tolerance vs f32 reference.
    if not jnp.allclose(out, ref, atol=5e-2, rtol=5e-2):
        raise AssertionError(f"mismatch: max abs err = {max_err:.3e}")

    print("KERNEL_OK")
</pallas_src>

<mosaic_0001>
module attributes {stable_mosaic.version = 11 : i64} {
  func.func @_xc_attention_kernel(%arg0: i32, %arg1: memref<1x16x64xbf16, #tpu.memory_space<vmem>>, %arg2: memref<192x64xbf16, #tpu.memory_space<vmem>>, %arg3: memref<64x64xf32, #tpu.memory_space<vmem>>, %arg4: memref<1x64xf32, #tpu.memory_space<vmem>>, %arg5: memref<8xf32, #tpu.memory_space<smem>>, %arg6: memref<1x16x64xf32, #tpu.memory_space<vmem>>, %arg7: memref<64x16xf32, #tpu.memory_space<vmem>>) attributes {dimension_semantics = [#tpu.dimension_semantics<parallel>], iteration_bounds = array<i64: 2>, scalar_prefetch = 0 : i64, scratch_operands = 1 : i64, tpu.core_type = #tpu.core_type<tc>, window_params = [{transform_indices = @transform_0, window_bounds = array<i64: 1, 16, 64>}, {pipeline_mode = #tpu.pipeline_mode<synchronous>, transform_indices = @transform_1, window_bounds = array<i64: 192, 64>}, {pipeline_mode = #tpu.pipeline_mode<synchronous>, transform_indices = @transform_2, window_bounds = array<i64: 64, 64>}, {pipeline_mode = #tpu.pipeline_mode<synchronous>, transform_indices = @transform_3, window_bounds = array<i64: 1, 64>}, {transform_indices = @transform_4, window_bounds = array<i64: 8>}, {transform_indices = @transform_5, window_bounds = array<i64: 1, 16, 64>}]} {
    %c0 = arith.constant 0 : index
    %c0_0 = arith.constant 0 : index
    %c0_1 = arith.constant 0 : index
    %0 = vector.load %arg1[%c0, %c0_0, %c0_1] : memref<1x16x64xbf16, #tpu.memory_space<vmem>>, vector<1x16x64xbf16>
    %1 = vector.shape_cast %0 : vector<1x16x64xbf16> to vector<16x64xbf16>
    %c0_2 = arith.constant 0 : index
    %c0_3 = arith.constant 0 : index
    %2 = vector.load %arg2[%c0_2, %c0_3] : memref<192x64xbf16, #tpu.memory_space<vmem>>, vector<192x64xbf16>
    %cst = arith.constant dense<0.000000e+00> : vector<192x16xf32>
    %3 = tpu.matmul %2, %1, %cst {dimension_numbers = #tpu.dot_dimension_numbers<[1], [1], [0], [0], [0, 0, 1, 0], [], []>} : vector<192x64xbf16>, vector<16x64xbf16>, vector<192x16xf32> -> vector<192x16xf32>
    %4 = vector.extract_strided_slice %3 {offsets = [0, 0], sizes = [64, 16], strides = [1, 1]} : vector<192x16xf32> to vector<64x16xf32>
    %5 = vector.extract_strided_slice %3 {offsets = [64, 0], sizes = [64, 16], strides = [1, 1]} : vector<192x16xf32> to vector<64x16xf32>
    %6 = vector.extract_strided_slice %3 {offsets = [128, 0], sizes = [64, 16], strides = [1, 1]} : vector<192x16xf32> to vector<64x16xf32>
    %7 = arith.mulf %4, %4 : vector<64x16xf32>
    %cst_4 = arith.constant dense<0.000000e+00> : vector<64xf32>
    %8 = vector.multi_reduction <add>, %7, %cst_4 [1] : vector<64x16xf32> to vector<64xf32>
    %9 = vector.shape_cast %8 : vector<64xf32> to vector<64x1xf32>
    %cst_5 = arith.constant 1.000000e-24 : f32
    %10 = vector.broadcast %cst_5 : f32 to vector<64x1xf32>
    %11 = arith.maximumf %9, %10 : vector<64x1xf32>
    %12 = math.rsqrt %11 : vector<64x1xf32>
    %13 = vector.broadcast %12 : vector<64x1xf32> to vector<64x16xf32>
    %14 = arith.mulf %4, %13 : vector<64x16xf32>
    %15 = arith.mulf %5, %5 : vector<64x16xf32>
    %cst_6 = arith.constant dense<0.000000e+00> : vector<64xf32>
    %16 = vector.multi_reduction <add>, %15, %cst_6 [1] : vector<64x16xf32> to vector<64xf32>
    %17 = vector.shape_cast %16 : vector<64xf32> to vector<64x1xf32>
    %cst_7 = arith.constant 1.000000e-24 : f32
    %18 = vector.broadcast %cst_7 : f32 to vector<64x1xf32>
    %19 = arith.maximumf %17, %18 : vector<64x1xf32>
    %20 = math.rsqrt %19 : vector<64x1xf32>
    %21 = vector.broadcast %20 : vector<64x1xf32> to vector<64x16xf32>
    %22 = arith.mulf %5, %21 : vector<64x16xf32>
    %23 = vector.extract_strided_slice %14 {offsets = [0, 0], sizes = [8, 16], strides = [1, 1]} : vector<64x16xf32> to vector<8x16xf32>
    %24 = arith.truncf %23 : vector<8x16xf32> to vector<8x16xbf16>
    %25 = vector.extract_strided_slice %22 {offsets = [0, 0], sizes = [8, 16], strides = [1, 1]} : vector<64x16xf32> to vector<8x16xf32>
    %26 = arith.truncf %25 : vector<8x16xf32> to vector<8x16xbf16>
    %27 = vector.extract_strided_slice %6 {offsets = [0, 0], sizes = [8, 16], strides = [1, 1]} : vector<64x16xf32> to vector<8x16xf32>
    %28 = arith.truncf %27 : vector<8x16xf32> to vector<8x16xbf16>
    %cst_8 = arith.constant dense<0.000000e+00> : vector<8x8xf32>
    %29 = tpu.matmul %24, %26, %cst_8 {dimension_numbers = #tpu.dot_dimension_numbers<[1], [1], [0], [0], [0, 0, 1, 0], [], []>} : vector<8x16xbf16>, vector<8x16xbf16>, vector<8x8xf32> -> vector<8x8xf32>
    %c0_9 = arith.constant 0 : index
    %30 = memref.load %arg5[%c0_9] : memref<8xf32, #tpu.memory_space<smem>>
    %31 = vector.broadcast %30 : f32 to vector<8x8xf32>
    %32 = arith.mulf %29, %31 : vector<8x8xf32>
    %cst_10 = arith.constant dense<0xFF800000> : vector<8xf32>
    %33 = vector.multi_reduction <maximumf>, %32, %cst_10 [1] : vector<8x8xf32> to vector<8xf32>
    %cst_11 = arith.constant 0xFF800000 : f32
    %34 = vector.broadcast %cst_11 : f32 to vector<8xf32>
    %35 = arith.maximumf %34, %33 : vector<8xf32>
    %36 = vector.shape_cast %35 : vector<8xf32> to vector<8x1xf32>
    %37 = vector.broadcast %36 : vector<8x1xf32> to vector<8x8xf32>
    %38 = arith.subf %32, %37 : vector<8x8xf32>
    %39 = math.exp %38 : vector<8x8xf32>
    %cst_12 = arith.constant dense<0.000000e+00> : vector<8xf32>
    %40 = vector.multi_reduction <add>, %39, %cst_12 [1] : vector<8x8xf32> to vector<8xf32>
    %41 = vector.shape_cast %40 : vector<8xf32> to vector<8x1xf32>
    %42 = vector.broadcast %41 : vector<8x1xf32> to vector<8x8xf32>
    %43 = arith.divf %39, %42 : vector<8x8xf32>
    %44 = arith.truncf %43 : vector<8x8xf32> to vector<8x8xbf16>
    %cst_13 = arith.constant dense<0.000000e+00> : vector<8x16xf32>
    %45 = tpu.matmul %44, %28, %cst_13 {dimension_numbers = #tpu.dot_dimension_numbers<[1], [0], [0], [1], [0, 0, 1, 1], [], []>} : vector<8x8xbf16>, vector<8x16xbf16>, vector<8x16xf32> -> vector<8x16xf32>
    %c0_14 = arith.constant 0 : index
    %c0_15 = arith.constant 0 : index
    %46 = vector.load %arg7[%c0_14, %c0_15] : memref<64x16xf32, #tpu.memory_space<vmem>>, vector<8x16xf32>
    tpu.vector_store %arg7[%c0_14, %c0_15], %45 {strides = array<i32>} : memref<64x16xf32, #tpu.memory_space<vmem>>, vector<8x16xf32>,
    %47 = vector.extract_strided_slice %14 {offsets = [8, 0], sizes = [8, 16], strides = [1, 1]} : vector<64x16xf32> to vector<8x16xf32>
    %48 = arith.truncf %47 : vector<8x16xf32> to vector<8x16xbf16>
    %49 = vector.extract_strided_slice %22 {offsets = [8, 0], sizes = [8, 16], strides = [1, 1]} : vector<64x16xf32> to vector<8x16xf32>
    %50 = arith.truncf %49 : vector<8x16xf32> to vector<8x16xbf16>
    %51 = vector.extract_strided_slice %6 {offsets = [8, 0], sizes = [8, 16], strides = [1, 1]} : vector<64x16xf32> to vector<8x16xf32>
    %52 = arith.truncf %51 : vector<8x16xf32> to vector<8x16xbf16>
    %cst_16 = arith.constant dense<0.000000e+00> : vector<8x8xf32>
    %53 = tpu.matmul %48, %50, %cst_16 {dimension_numbers = #tpu.dot_dimension_numbers<[1], [1], [0], [0], [0, 0, 1, 0], [], []>} : vector<8x16xbf16>, vector<8x16xbf16>, vector<8x8xf32> -> vector<8x8xf32>
    %c1 = arith.constant 1 : index
    %54 = memref.load %arg5[%c1] : memref<8xf32, #tpu.memory_space<smem>>
    %55 = vector.broadcast %54 : f32 to vector<8x8xf32>
    %56 = arith.mulf %53, %55 : vector<8x8xf32>
    %cst_17 = arith.constant dense<0xFF800000> : vector<8xf32>
    %57 = vector.multi_reduction <maximumf>, %56, %cst_17 [1] : vector<8x8xf32> to vector<8xf32>
    %cst_18 = arith.constant 0xFF800000 : f32
    %58 = vector.broadcast %cst_18 : f32 to vector<8xf32>
    %59 = arith.maximumf %58, %57 : vector<8xf32>
    %60 = vector.shape_cast %59 : vector<8xf32> to vector<8x1xf32>
    %61 = vector.broadcast %60 : vector<8x1xf32> to vector<8x8xf32>
    %62 = arith.subf %56, %61 : vector<8x8xf32>
    %63 = math.exp %62 : vector<8x8xf32>
    %cst_19 = arith.constant dense<0.000000e+00> : vector<8xf32>
    %64 = vector.multi_reduction <add>, %63, %cst_19 [1] : vector<8x8xf32> to vector<8xf32>
    %65 = vector.shape_cast %64 : vector<8xf32> to vector<8x1xf32>
    %66 = vector.broadcast %65 : vector<8x1xf32> to vector<8x8xf32>
    %67 = arith.divf %63, %66 : vector<8x8xf32>
    %68 = arith.truncf %67 : vector<8x8xf32> to vector<8x8xbf16>
    %cst_20 = arith.constant dense<0.000000e+00> : vector<8x16xf32>
    %69 = tpu.matmul %68, %52, %cst_20 {dimension_numbers = #tpu.dot_dimension_numbers<[1], [0], [0], [1], [0, 0, 1, 1], [], []>} : vector<8x8xbf16>, vector<8x16xbf16>, vector<8x16xf32> -> vector<8x16xf32>
    %c8 = arith.constant 8 : index
    %c0_21 = arith.constant 0 : index
    %70 = vector.load %arg7[%c8, %c0_21] : memref<64x16xf32, #tpu.memory_space<vmem>>, vector<8x16xf32>
    tpu.vector_store %arg7[%c8, %c0_21], %69 {strides = array<i32>} : memref<64x16xf32, #tpu.memory_space<vmem>>, vector<8x16xf32>,
    %71 = vector.extract_strided_slice %14 {offsets = [16, 0], sizes = [8, 16], strides = [1, 1]} : vector<64x16xf32> to vector<8x16xf32>
    %72 = arith.truncf %71 : vector<8x16xf32> to vector<8x16xbf16>
    %73 = vector.extract_strided_slice %22 {offsets = [16, 0], sizes = [8, 16], strides = [1, 1]} : vector<64x16xf32> to vector<8x16xf32>
    %74 = arith.truncf %73 : vector<8x16xf32> to vector<8x16xbf16>
    %75 = vector.extract_strided_slice %6 {offsets = [16, 0], sizes = [8, 16], strides = [1, 1]} : vector<64x16xf32> to vector<8x16xf32>
    %76 = arith.truncf %75 : vector<8x16xf32> to vector<8x16xbf16>
    %cst_22 = arith.constant dense<0.000000e+00> : vector<8x8xf32>
    %77 = tpu.matmul %72, %74, %cst_22 {dimension_numbers = #tpu.dot_dimension_numbers<[1], [1], [0], [0], [0, 0, 1, 0], [], []>} : vector<8x16xbf16>, vector<8x16xbf16>, vector<8x8xf32> -> vector<8x8xf32>
    %c2 = arith.constant 2 : index
    %78 = memref.load %arg5[%c2] : memref<8xf32, #tpu.memory_space<smem>>
    %79 = vector.broadcast %78 : f32 to vector<8x8xf32>
    %80 = arith.mulf %77, %79 : vector<8x8xf32>
    %cst_23 = arith.constant dense<0xFF800000> : vector<8xf32>
    %81 = vector.multi_reduction <maximumf>, %80, %cst_23 [1] : vector<8x8xf32> to vector<8xf32>
    %cst_24 = arith.constant 0xFF800000 : f32
    %82 = vector.broadcast %cst_24 : f32 to vector<8xf32>
    %83 = arith.maximumf %82, %81 : vector<8xf32>
    %84 = vector.shape_cast %83 : vector<8xf32> to vector<8x1xf32>
    %85 = vector.broadcast %84 : vector<8x1xf32> to vector<8x8xf32>
    %86 = arith.subf %80, %85 : vector<8x8xf32>
    %87 = math.exp %86 : vector<8x8xf32>
    %cst_25 = arith.constant dense<0.000000e+00> : vector<8xf32>
    %88 = vector.multi_reduction <add>, %87, %cst_25 [1] : vector<8x8xf32> to vector<8xf32>
    %89 = vector.shape_cast %88 : vector<8xf32> to vector<8x1xf32>
    %90 = vector.broadcast %89 : vector<8x1xf32> to vector<8x8xf32>
    %91 = arith.divf %87, %90 : vector<8x8xf32>
    %92 = arith.truncf %91 : vector<8x8xf32> to vector<8x8xbf16>
    %cst_26 = arith.constant dense<0.000000e+00> : vector<8x16xf32>
    %93 = tpu.matmul %92, %76, %cst_26 {dimension_numbers = #tpu.dot_dimension_numbers<[1], [0], [0], [1], [0, 0, 1, 1], [], []>} : vector<8x8xbf16>, vector<8x16xbf16>, vector<8x16xf32> -> vector<8x16xf32>
    %c16 = arith.constant 16 : index
    %c0_27 = arith.constant 0 : index
    %94 = vector.load %arg7[%c16, %c0_27] : memref<64x16xf32, #tpu.memory_space<vmem>>, vector<8x16xf32>
    tpu.vector_store %arg7[%c16, %c0_27], %93 {strides = array<i32>} : memref<64x16xf32, #tpu.memory_space<vmem>>, vector<8x16xf32>,
    %95 = vector.extract_strided_slice %14 {offsets = [24, 0], sizes = [8, 16], strides = [1, 1]} : vector<64x16xf32> to vector<8x16xf32>
    %96 = arith.truncf %95 : vector<8x16xf32> to vector<8x16xbf16>
    %97 = vector.extract_strided_slice %22 {offsets = [24, 0], sizes = [8, 16], strides = [1, 1]} : vector<64x16xf32> to vector<8x16xf32>
    %98 = arith.truncf %97 : vector<8x16xf32> to vector<8x16xbf16>
    %99 = vector.extract_strided_slice %6 {offsets = [24, 0], sizes = [8, 16], strides = [1, 1]} : vector<64x16xf32> to vector<8x16xf32>
    %100 = arith.truncf %99 : vector<8x16xf32> to vector<8x16xbf16>
    %cst_28 = arith.constant dense<0.000000e+00> : vector<8x8xf32>
    %101 = tpu.matmul %96, %98, %cst_28 {dimension_numbers = #tpu.dot_dimension_numbers<[1], [1], [0], [0], [0, 0, 1, 0], [], []>} : vector<8x16xbf16>, vector<8x16xbf16>, vector<8x8xf32> -> vector<8x8xf32>
    %c3 = arith.constant 3 : index
    %102 = memref.load %arg5[%c3] : memref<8xf32, #tpu.memory_space<smem>>
    %103 = vector.broadcast %102 : f32 to vector<8x8xf32>
    %104 = arith.mulf %101, %103 : vector<8x8xf32>
    %cst_29 = arith.constant dense<0xFF800000> : vector<8xf32>
    %105 = vector.multi_reduction <maximumf>, %104, %cst_29 [1] : vector<8x8xf32> to vector<8xf32>
    %cst_30 = arith.constant 0xFF800000 : f32
    %106 = vector.broadcast %cst_30 : f32 to vector<8xf32>
    %107 = arith.maximumf %106, %105 : vector<8xf32>
    %108 = vector.shape_cast %107 : vector<8xf32> to vector<8x1xf32>
    %109 = vector.broadcast %108 : vector<8x1xf32> to vector<8x8xf32>
    %110 = arith.subf %104, %109 : vector<8x8xf32>
    %111 = math.exp %110 : vector<8x8xf32>
    %cst_31 = arith.constant dense<0.000000e+00> : vector<8xf32>
    %112 = vector.multi_reduction <add>, %111, %cst_31 [1] : vector<8x8xf32> to vector<8xf32>
    %113 = vector.shape_cast %112 : vector<8xf32> to vector<8x1xf32>
    %114 = vector.broadcast %113 : vector<8x1xf32> to vector<8x8xf32>
    %115 = arith.divf %111, %114 : vector<8x8xf32>
    %116 = arith.truncf %115 : vector<8x8xf32> to vector<8x8xbf16>
    %cst_32 = arith.constant dense<0.000000e+00> : vector<8x16xf32>
    %117 = tpu.matmul %116, %100, %cst_32 {dimension_numbers = #tpu.dot_dimension_numbers<[1], [0], [0], [1], [0, 0, 1, 1], [], []>} : vector<8x8xbf16>, vector<8x16xbf16>, vector<8x16xf32> -> vector<8x16xf32>
    %c24 = arith.constant 24 : index
    %c0_33 = arith.constant 0 : index
    %118 = vector.load %arg7[%c24, %c0_33] : memref<64x16xf32, #tpu.memory_space<vmem>>, vector<8x16xf32>
    tpu.vector_store %arg7[%c24, %c0_33], %117 {strides = array<i32>} : memref<64x16xf32, #tpu.memory_space<vmem>>, vector<8x16xf32>,
    %119 = vector.extract_strided_slice %14 {offsets = [32, 0], sizes = [8, 16], strides = [1, 1]} : vector<64x16xf32> to vector<8x16xf32>
    %120 = arith.truncf %119 : vector<8x16xf32> to vector<8x16xbf16>
    %121 = vector.extract_strided_slice %22 {offsets = [32, 0], sizes = [8, 16], strides = [1, 1]} : vector<64x16xf32> to vector<8x16xf32>
    %122 = arith.truncf %121 : vector<8x16xf32> to vector<8x16xbf16>
    %123 = vector.extract_strided_slice %6 {offsets = [32, 0], sizes = [8, 16], strides = [1, 1]} : vector<64x16xf32> to vector<8x16xf32>
    %124 = arith.truncf %123 : vector<8x16xf32> to vector<8x16xbf16>
    %cst_34 = arith.constant dense<0.000000e+00> : vector<8x8xf32>
    %125 = tpu.matmul %120, %122, %cst_34 {dimension_numbers = #tpu.dot_dimension_numbers<[1], [1], [0], [0], [0, 0, 1, 0], [], []>} : vector<8x16xbf16>, vector<8x16xbf16>, vector<8x8xf32> -> vector<8x8xf32>
    %c4 = arith.constant 4 : index
    %126 = memref.load %arg5[%c4] : memref<8xf32, #tpu.memory_space<smem>>
    %127 = vector.broadcast %126 : f32 to vector<8x8xf32>
    %128 = arith.mulf %125, %127 : vector<8x8xf32>
    %cst_35 = arith.constant dense<0xFF800000> : vector<8xf32>
    %129 = vector.multi_reduction <maximumf>, %128, %cst_35 [1] : vector<8x8xf32> to vector<8xf32>
    %cst_36 = arith.constant 0xFF800000 : f32
    %130 = vector.broadcast %cst_36 : f32 to vector<8xf32>
    %131 = arith.maximumf %130, %129 : vector<8xf32>
    %132 = vector.shape_cast %131 : vector<8xf32> to vector<8x1xf32>
    %133 = vector.broadcast %132 : vector<8x1xf32> to vector<8x8xf32>
    %134 = arith.subf %128, %133 : vector<8x8xf32>
    %135 = math.exp %134 : vector<8x8xf32>
    %cst_37 = arith.constant dense<0.000000e+00> : vector<8xf32>
    %136 = vector.multi_reduction <add>, %135, %cst_37 [1] : vector<8x8xf32> to vector<8xf32>
    %137 = vector.shape_cast %136 : vector<8xf32> to vector<8x1xf32>
    %138 = vector.broadcast %137 : vector<8x1xf32> to vector<8x8xf32>
    %139 = arith.divf %135, %138 : vector<8x8xf32>
    %140 = arith.truncf %139 : vector<8x8xf32> to vector<8x8xbf16>
    %cst_38 = arith.constant dense<0.000000e+00> : vector<8x16xf32>
    %141 = tpu.matmul %140, %124, %cst_38 {dimension_numbers = #tpu.dot_dimension_numbers<[1], [0], [0], [1], [0, 0, 1, 1], [], []>} : vector<8x8xbf16>, vector<8x16xbf16>, vector<8x16xf32> -> vector<8x16xf32>
    %c32 = arith.constant 32 : index
    %c0_39 = arith.constant 0 : index
    %142 = vector.load %arg7[%c32, %c0_39] : memref<64x16xf32, #tpu.memory_space<vmem>>, vector<8x16xf32>
    tpu.vector_store %arg7[%c32, %c0_39], %141 {strides = array<i32>} : memref<64x16xf32, #tpu.memory_space<vmem>>, vector<8x16xf32>,
    %143 = vector.extract_strided_slice %14 {offsets = [40, 0], sizes = [8, 16], strides = [1, 1]} : vector<64x16xf32> to vector<8x16xf32>
    %144 = arith.truncf %143 : vector<8x16xf32> to vector<8x16xbf16>
    %145 = vector.extract_strided_slice %22 {offsets = [40, 0], sizes = [8, 16], strides = [1, 1]} : vector<64x16xf32> to vector<8x16xf32>
    %146 = arith.truncf %145 : vector<8x16xf32> to vector<8x16xbf16>
    %147 = vector.extract_strided_slice %6 {offsets = [40, 0], sizes = [8, 16], strides = [1, 1]} : vector<64x16xf32> to vector<8x16xf32>
    %148 = arith.truncf %147 : vector<8x16xf32> to vector<8x16xbf16>
    %cst_40 = arith.constant dense<0.000000e+00> : vector<8x8xf32>
    %149 = tpu.matmul %144, %146, %cst_40 {dimension_numbers = #tpu.dot_dimension_numbers<[1], [1], [0], [0], [0, 0, 1, 0], [], []>} : vector<8x16xbf16>, vector<8x16xbf16>, vector<8x8xf32> -> vector<8x8xf32>
    %c5 = arith.constant 5 : index
    %150 = memref.load %arg5[%c5] : memref<8xf32, #tpu.memory_space<smem>>
    %151 = vector.broadcast %150 : f32 to vector<8x8xf32>
    %152 = arith.mulf %149, %151 : vector<8x8xf32>
    %cst_41 = arith.constant dense<0xFF800000> : vector<8xf32>
    %153 = vector.multi_reduction <maximumf>, %152, %cst_41 [1] : vector<8x8xf32> to vector<8xf32>
    %cst_42 = arith.constant 0xFF800000 : f32
    %154 = vector.broadcast %cst_42 : f32 to vector<8xf32>
    %155 = arith.maximumf %154, %153 : vector<8xf32>
    %156 = vector.shape_cast %155 : vector<8xf32> to vector<8x1xf32>
    %157 = vector.broadcast %156 : vector<8x1xf32> to vector<8x8xf32>
    %158 = arith.subf %152, %157 : vector<8x8xf32>
    %159 = math.exp %158 : vector<8x8xf32>
    %cst_43 = arith.constant dense<0.000000e+00> : vector<8xf32>
    %160 = vector.multi_reduction <add>, %159, %cst_43 [1] : vector<8x8xf32> to vector<8xf32>
    %161 = vector.shape_cast %160 : vector<8xf32> to vector<8x1xf32>
    %162 = vector.broadcast %161 : vector<8x1xf32> to vector<8x8xf32>
    %163 = arith.divf %159, %162 : vector<8x8xf32>
    %164 = arith.truncf %163 : vector<8x8xf32> to vector<8x8xbf16>
    %cst_44 = arith.constant dense<0.000000e+00> : vector<8x16xf32>
    %165 = tpu.matmul %164, %148, %cst_44 {dimension_numbers = #tpu.dot_dimension_numbers<[1], [0], [0], [1], [0, 0, 1, 1], [], []>} : vector<8x8xbf16>, vector<8x16xbf16>, vector<8x16xf32> -> vector<8x16xf32>
    %c40 = arith.constant 40 : index
    %c0_45 = arith.constant 0 : index
    %166 = vector.load %arg7[%c40, %c0_45] : memref<64x16xf32, #tpu.memory_space<vmem>>, vector<8x16xf32>
    tpu.vector_store %arg7[%c40, %c0_45], %165 {strides = array<i32>} : memref<64x16xf32, #tpu.memory_space<vmem>>, vector<8x16xf32>,
    %167 = vector.extract_strided_slice %14 {offsets = [48, 0], sizes = [8, 16], strides = [1, 1]} : vector<64x16xf32> to vector<8x16xf32>
    %168 = arith.truncf %167 : vector<8x16xf32> to vector<8x16xbf16>
    %169 = vector.extract_strided_slice %22 {offsets = [48, 0], sizes = [8, 16], strides = [1, 1]} : vector<64x16xf32> to vector<8x16xf32>
    %170 = arith.truncf %169 : vector<8x16xf32> to vector<8x16xbf16>
    %171 = vector.extract_strided_slice %6 {offsets = [48, 0], sizes = [8, 16], strides = [1, 1]} : vector<64x16xf32> to vector<8x16xf32>
    %172 = arith.truncf %171 : vector<8x16xf32> to vector<8x16xbf16>
    %cst_46 = arith.constant dense<0.000000e+00> : vector<8x8xf32>
    %173 = tpu.matmul %168, %170, %cst_46 {dimension_numbers = #tpu.dot_dimension_numbers<[1], [1], [0], [0], [0, 0, 1, 0], [], []>} : vector<8x16xbf16>, vector<8x16xbf16>, vector<8x8xf32> -> vector<8x8xf32>
    %c6 = arith.constant 6 : index
    %174 = memref.load %arg5[%c6] : memref<8xf32, #tpu.memory_space<smem>>
    %175 = vector.broadcast %174 : f32 to vector<8x8xf32>
    %176 = arith.mulf %173, %175 : vector<8x8xf32>
    %cst_47 = arith.constant dense<0xFF800000> : vector<8xf32>
    %177 = vector.multi_reduction <maximumf>, %176, %cst_47 [1] : vector<8x8xf32> to vector<8xf32>
    %cst_48 = arith.constant 0xFF800000 : f32
    %178 = vector.broadcast %cst_48 : f32 to vector<8xf32>
    %179 = arith.maximumf %178, %177 : vector<8xf32>
    %180 = vector.shape_cast %179 : vector<8xf32> to vector<8x1xf32>
    %181 = vector.broadcast %180 : vector<8x1xf32> to vector<8x8xf32>
    %182 = arith.subf %176, %181 : vector<8x8xf32>
    %183 = math.exp %182 : vector<8x8xf32>
    %cst_49 = arith.constant dense<0.000000e+00> : vector<8xf32>
    %184 = vector.multi_reduction <add>, %183, %cst_49 [1] : vector<8x8xf32> to vector<8xf32>
    %185 = vector.shape_cast %184 : vector<8xf32> to vector<8x1xf32>
    %186 = vector.broadcast %185 : vector<8x1xf32> to vector<8x8xf32>
    %187 = arith.divf %183, %186 : vector<8x8xf32>
    %188 = arith.truncf %187 : vector<8x8xf32> to vector<8x8xbf16>
    %cst_50 = arith.constant dense<0.000000e+00> : vector<8x16xf32>
    %189 = tpu.matmul %188, %172, %cst_50 {dimension_numbers = #tpu.dot_dimension_numbers<[1], [0], [0], [1], [0, 0, 1, 1], [], []>} : vector<8x8xbf16>, vector<8x16xbf16>, vector<8x16xf32> -> vector<8x16xf32>
    %c48 = arith.constant 48 : index
    %c0_51 = arith.constant 0 : index
    %190 = vector.load %arg7[%c48, %c0_51] : memref<64x16xf32, #tpu.memory_space<vmem>>, vector<8x16xf32>
    tpu.vector_store %arg7[%c48, %c0_51], %189 {strides = array<i32>} : memref<64x16xf32, #tpu.memory_space<vmem>>, vector<8x16xf32>,
    %191 = vector.extract_strided_slice %14 {offsets = [56, 0], sizes = [8, 16], strides = [1, 1]} : vector<64x16xf32> to vector<8x16xf32>
    %192 = arith.truncf %191 : vector<8x16xf32> to vector<8x16xbf16>
    %193 = vector.extract_strided_slice %22 {offsets = [56, 0], sizes = [8, 16], strides = [1, 1]} : vector<64x16xf32> to vector<8x16xf32>
    %194 = arith.truncf %193 : vector<8x16xf32> to vector<8x16xbf16>
    %195 = vector.extract_strided_slice %6 {offsets = [56, 0], sizes = [8, 16], strides = [1, 1]} : vector<64x16xf32> to vector<8x16xf32>
    %196 = arith.truncf %195 : vector<8x16xf32> to vector<8x16xbf16>
    %cst_52 = arith.constant dense<0.000000e+00> : vector<8x8xf32>
    %197 = tpu.matmul %192, %194, %cst_52 {dimension_numbers = #tpu.dot_dimension_numbers<[1], [1], [0], [0], [0, 0, 1, 0], [], []>} : vector<8x16xbf16>, vector<8x16xbf16>, vector<8x8xf32> -> vector<8x8xf32>
    %c7 = arith.constant 7 : index
    %198 = memref.load %arg5[%c7] : memref<8xf32, #tpu.memory_space<smem>>
    %199 = vector.broadcast %198 : f32 to vector<8x8xf32>
    %200 = arith.mulf %197, %199 : vector<8x8xf32>
    %cst_53 = arith.constant dense<0xFF800000> : vector<8xf32>
    %201 = vector.multi_reduction <maximumf>, %200, %cst_53 [1] : vector<8x8xf32> to vector<8xf32>
    %cst_54 = arith.constant 0xFF800000 : f32
    %202 = vector.broadcast %cst_54 : f32 to vector<8xf32>
    %203 = arith.maximumf %202, %201 : vector<8xf32>
    %204 = vector.shape_cast %203 : vector<8xf32> to vector<8x1xf32>
    %205 = vector.broadcast %204 : vector<8x1xf32> to vector<8x8xf32>
    %206 = arith.subf %200, %205 : vector<8x8xf32>
    %207 = math.exp %206 : vector<8x8xf32>
    %cst_55 = arith.constant dense<0.000000e+00> : vector<8xf32>
    %208 = vector.multi_reduction <add>, %207, %cst_55 [1] : vector<8x8xf32> to vector<8xf32>
    %209 = vector.shape_cast %208 : vector<8xf32> to vector<8x1xf32>
    %210 = vector.broadcast %209 : vector<8x1xf32> to vector<8x8xf32>
    %211 = arith.divf %207, %210 : vector<8x8xf32>
    %212 = arith.truncf %211 : vector<8x8xf32> to vector<8x8xbf16>
    %cst_56 = arith.constant dense<0.000000e+00> : vector<8x16xf32>
    %213 = tpu.matmul %212, %196, %cst_56 {dimension_numbers = #tpu.dot_dimension_numbers<[1], [0], [0], [1], [0, 0, 1, 1], [], []>} : vector<8x8xbf16>, vector<8x16xbf16>, vector<8x16xf32> -> vector<8x16xf32>
    %c56 = arith.constant 56 : index
    %c0_57 = arith.constant 0 : index
    %214 = vector.load %arg7[%c56, %c0_57] : memref<64x16xf32, #tpu.memory_space<vmem>>, vector<8x16xf32>
    tpu.vector_store %arg7[%c56, %c0_57], %213 {strides = array<i32>} : memref<64x16xf32, #tpu.memory_space<vmem>>, vector<8x16xf32>,
    %c0_58 = arith.constant 0 : index
    %c0_59 = arith.constant 0 : index
    %215 = vector.load %arg7[%c0_58, %c0_59] : memref<64x16xf32, #tpu.memory_space<vmem>>, vector<64x16xf32>
    %c0_60 = arith.constant 0 : index
    %c0_61 = arith.constant 0 : index
    %216 = vector.load %arg3[%c0_60, %c0_61] : memref<64x64xf32, #tpu.memory_space<vmem>>, vector<64x64xf32>
    %cst_62 = arith.constant dense<0.000000e+00> : vector<16x64xf32>
    %217 = tpu.matmul %215, %216, %cst_62 {dimension_numbers = #tpu.dot_dimension_numbers<[0], [0], [1], [1], [0, 1, 1, 1], [], []>} : vector<64x16xf32>, vector<64x64xf32>, vector<16x64xf32> -> vector<16x64xf32>
    %c0_63 = arith.constant 0 : index
    %c0_64 = arith.constant 0 : index
    %218 = vector.load %arg4[%c0_63, %c0_64] : memref<1x64xf32, #tpu.memory_space<vmem>>, vector<1x64xf32>
    %219 = vector.broadcast %218 : vector<1x64xf32> to vector<16x64xf32>
    %220 = arith.addf %217, %219 : vector<16x64xf32>
    %c0_65 = arith.constant 0 : index
    %c0_66 = arith.constant 0 : index
    %c0_67 = arith.constant 0 : index
    %221 = vector.load %arg6[%c0_65, %c0_66, %c0_67] : memref<1x16x64xf32, #tpu.memory_space<vmem>>, vector<1x16x64xf32>
    %222 = vector.shape_cast %221 : vector<1x16x64xf32> to vector<16x64xf32>
    %223 = vector.shape_cast %220 : vector<16x64xf32> to vector<1x16x64xf32>
    tpu.vector_store %arg6[%c0_65, %c0_66, %c0_67], %223 {strides = array<i32>} : memref<1x16x64xf32, #tpu.memory_space<vmem>>, vector<1x16x64xf32>,
    return
  }
  func.func @transform_0(%arg0: i32) -> (i32, i32, i32) {
    %c0_i32 = arith.constant 0 : i32
    %c0_i32_0 = arith.constant 0 : i32
    %c0_i32_1 = arith.constant 0 : i32
    return %arg0, %c0_i32, %c0_i32_0 : i32, i32, i32
  }
  func.func @transform_1(%arg0: i32) -> (i32, i32) {
    %c0_i32 = arith.constant 0 : i32
    %c0_i32_0 = arith.constant 0 : i32
    %c0_i32_1 = arith.constant 0 : i32
    return %c0_i32, %c0_i32_0 : i32, i32
  }
  func.func @transform_2(%arg0: i32) -> (i32, i32) {
    %c0_i32 = arith.constant 0 : i32
    %c0_i32_0 = arith.constant 0 : i32
    %c0_i32_1 = arith.constant 0 : i32
    return %c0_i32, %c0_i32_0 : i32, i32
  }
  func.func @transform_3(%arg0: i32) -> (i32, i32) {
    %c0_i32 = arith.constant 0 : i32
    %c0_i32_0 = arith.constant 0 : i32
    %c0_i32_1 = arith.constant 0 : i32
    return %c0_i32, %c0_i32_0 : i32, i32
  }
  func.func @transform_4(%arg0: i32) -> i32 {
    %c0_i32 = arith.constant 0 : i32
    %c0_i32_0 = arith.constant 0 : i32
    return %c0_i32 : i32
  }
  func.func @transform_5(%arg0: i32) -> (i32, i32, i32) {
    %c0_i32 = arith.constant 0 : i32
    %c0_i32_0 = arith.constant 0 : i32
    %c0_i32_1 = arith.constant 0 : i32
    return %arg0, %c0_i32, %c0_i32_0 : i32, i32, i32
  }
}

</mosaic_0001>

<llo_original>
// kernel: tpu_custom_call.1
$region0: #{tpu_custom_call.1}
  #allocation0 [shape = 'u32[]', space=smem, size = 0x4, offset = 0x4, fixed_abs, tag = 'smem constant byte address 0x4 - core index']
  #allocation1 [shape = 'u32[144,128]{1,0:T(1,128)}', space=vmem, size = 0x12000, scoped, tag = 'internal scratch']
  #allocation2 [shape = 'f32[64,16]{1,0:T(8,128)}', space=vmem, size = 0x8000, scoped, tag = 'scratch operand']
  %s0 = inlined_call_operand.vmem [shape: bf16[2,16,64], index: 0, kind: input, shape index: {}]
  %s1 = inlined_call_operand.vmem [shape: bf16[192,64], index: 1, kind: input, shape index: {}]
  %s2 = inlined_call_operand.vmem [shape: f32[64,64], index: 2, kind: input, shape index: {}]
  %s3 = inlined_call_operand.vmem [shape: f32[1,64], index: 3, kind: input, shape index: {}]
  %s4 = inlined_call_operand.vmem [shape: f32[8], index: 4, kind: input, shape index: {}]
  %s5 = inlined_call_operand.hbm [shape: f32[2,16,64], index: 5, kind: output, shape index: {}]
  %s6 = sld [smem:[#allocation0]]
  $region57: #{tpu_custom_call.1} parent=0
    _
  %s8 = ssub.s32 1, %s6
  %s9 = scalar_select 0, %s8, %s6
  $region1: #{tpu_custom_call.1} parent=0
    #allocation3 [shape = 'u8[512]{0}', space=smem, size = 0x200, scoped, tag = 'input window, operand 4, single buffered']
    #allocation4 [shape = 's32[2]{0}', space=sflag, size = 0x8, scoped, tag = 'scoped memory for tpu_custom_call.1']
    #allocation5 [shape = 's32[2]{0}', space=sflag, size = 0x8, scoped, tag = 'scoped memory for tpu_custom_call.1']
    #allocation6 [shape = 'u8[16384]{0}', space=vmem, size = 0x4000, scoped, tag = 'output window, operand 0']
    %10 = vsyncpa [#allocation5], 0
    %11 = vsyncpa [#allocation4], 0
    %s12 = scalar_lea.sflag [#allocation4], 1
    %13 = vsyncpa %s12, 0
    loop: start=0, step=1, limit=4
    $region2: #{tpu_custom_call.1} parent=1 // loop_pre_header
      _
    $region3: #{tpu_custom_call.1} parent=1 // loop_header
      %s15 = sphi 0, %s19
      %p16 = scmp.ge.s32.totalorder %s15, 4
      %s25 = sphi 0, %s27
      %s28 = sphi 0, %s25
      %s29 = sphi 0, %s28
      %s45 = sphi 0, %s29
      %s49 = sphi 0, %s49
      %s51 = sphi 0, %s49
      %s52 = sphi 0, %s51
      %s66 = sphi 0, %s52
      %s70 = sphi 0, %s70
      %s72 = sphi 0, %s70
      %s73 = sphi 0, %s72
      %s87 = sphi 0, %s73
      %s91 = sphi 0, %s91
      %s93 = sphi 0, %s91
      %s94 = sphi 0, %s93
      %s108 = sphi 0, %s94
      %s112 = sphi 0, %s112
      %s114 = sphi 0, %s112
      %s115 = sphi 0, %s114
      %s129 = sphi 0, %s115
      %s135 = sphi 0, %s137
      %s138 = sphi 0, %s135
      %s139 = sphi 0, %s138
      %s155 = sphi 0, %s139
    $region4: #{tpu_custom_call.1} parent=1 // loop_header_branch
      %18 = sbr.rel (%p16) target = $region8
    $region5: #{tpu_custom_call.1} parent=1 // loop_body
      %s20 = ssub.s32 %s15, 1
      %s21 = ssub.s32 %s15, 2
      %s22 = sadd.s32 %s15, 1
      %s23 = ssub.s32 %s15, %s22
      %p24 = scmp.eq.s32.totalorder %s23, 0
      %s26 = sadd.s32 %s25, 1
      %s27 = scalar_select %p24, %s25, %s26
      %p30 = pneg %p24
      %p31 = scmp.eq.s32.totalorder %s15, 1
      %p32 = por %p30, %p31
      %p33 = scmp.ne.s32.totalorder %s25, %s28
      %p34 = scmp.eq.s32.totalorder %s15, 0
      %p35 = por %p33, %p34
      %p36 = scmp.ne.s32.totalorder %s25, %s28
      %p37 = scmp.eq.s32.totalorder %s20, 1
      %p38 = por %p36, %p37
      %p39 = scmp.ne.s32.totalorder %s28, %s29
      %p40 = scmp.eq.s32.totalorder %s20, 0
      %p41 = por %p39, %p40
      %p42 = scmp.ne.s32.totalorder %s28, %s29
      %p43 = scmp.eq.s32.totalorder %s21, 1
      %p44 = por %p42, %p43
      %p46 = scmp.ne.s32.totalorder %s29, %s45
      %p47 = scmp.eq.s32.totalorder %s21, 0
      %p48 = por %p46, %p47
      %s50 = sadd.s32 %s49, 1
      %p53 = scmp.eq.s32.totalorder %s15, 1
      %p54 = scmp.ne.s32.totalorder %s49, %s51
      %p55 = scmp.eq.s32.totalorder %s15, 0
      %p56 = por %p54, %p55
      %p57 = scmp.ne.s32.totalorder %s49, %s51
      %p58 = scmp.eq.s32.totalorder %s20, 1
      %p59 = por %p57, %p58
      %p60 = scmp.ne.s32.totalorder %s51, %s52
      %p61 = scmp.eq.s32.totalorder %s20, 0
      %p62 = por %p60, %p61
      %p63 = scmp.ne.s32.totalorder %s51, %s52
      %p64 = scmp.eq.s32.totalorder %s21, 1
      %p65 = por %p63, %p64
      %p67 = scmp.ne.s32.totalorder %s52, %s66
      %p68 = scmp.eq.s32.totalorder %s21, 0
      %p69 = por %p67, %p68
      %s71 = sadd.s32 %s70, 1
      %p74 = scmp.eq.s32.totalorder %s15, 1
      %p75 = scmp.ne.s32.totalorder %s70, %s72
      %p76 = scmp.eq.s32.totalorder %s15, 0
      %p77 = por %p75, %p76
      %p78 = scmp.ne.s32.totalorder %s70, %s72
      %p79 = scmp.eq.s32.totalorder %s20, 1
      %p80 = por %p78, %p79
      %p81 = scmp.ne.s32.totalorder %s72, %s73
      %p82 = scmp.eq.s32.totalorder %s20, 0
      %p83 = por %p81, %p82
      %p84 = scmp.ne.s32.totalorder %s72, %s73
      %p85 = scmp.eq.s32.totalorder %s21, 1
      %p86 = por %p84, %p85
      %p88 = scmp.ne.s32.totalorder %s73, %s87
      %p89 = scmp.eq.s32.totalorder %s21, 0
      %p90 = por %p88, %p89
      %s92 = sadd.s32 %s91, 1
      %p95 = scmp.eq.s32.totalorder %s15, 1
      %p96 = scmp.ne.s32.totalorder %s91, %s93
      %p97 = scmp.eq.s32.totalorder %s15, 0
      %p98 = por %p96, %p97
      %p99 = scmp.ne.s32.totalorder %s91, %s93
      %p100 = scmp.eq.s32.totalorder %s20, 1
      %p101 = por %p99, %p100
      %p102 = scmp.ne.s32.totalorder %s93, %s94
      %p103 = scmp.eq.s32.totalorder %s20, 0
      %p104 = por %p102, %p103
      %p105 = scmp.ne.s32.totalorder %s93, %s94
      %p106 = scmp.eq.s32.totalorder %s21, 1
      %p107 = por %p105, %p106
      %p109 = scmp.ne.s32.totalorder %s94, %s108
      %p110 = scmp.eq.s32.totalorder %s21, 0
      %p111 = por %p109, %p110
      %s113 = sadd.s32 %s112, 1
      %p116 = scmp.eq.s32.totalorder %s15, 1
      %p117 = scmp.ne.s32.totalorder %s112, %s114
      %p118 = scmp.eq.s32.totalorder %s15, 0
      %p119 = por %p117, %p118
      %p120 = scmp.ne.s32.totalorder %s112, %s114
      %p121 = scmp.eq.s32.totalorder %s20, 1
      %p122 = por %p120, %p121
      %p123 = scmp.ne.s32.totalorder %s114, %s115
      %p124 = scmp.eq.s32.totalorder %s20, 0
      %p125 = por %p123, %p124
      %p126 = scmp.ne.s32.totalorder %s114, %s115
      %p127 = scmp.eq.s32.totalorder %s21, 1
      %p128 = por %p126, %p127
      %p130 = scmp.ne.s32.totalorder %s115, %s129
      %p131 = scmp.eq.s32.totalorder %s21, 0
      %p132 = por %p130, %p131
      %s133 = ssub.s32 %s15, %s22
      %p134 = scmp.eq.s32.totalorder %s133, 0
      %s136 = sadd.s32 %s135, 1
      %s137 = scalar_select %p134, %s135, %s136
      %p140 = pneg %p134
      %p141 = scmp.eq.s32.totalorder %s15, 1
      %p142 = por %p140, %p141
      %p143 = scmp.ne.s32.totalorder %s135, %s138
      %p144 = scmp.eq.s32.totalorder %s15, 0
      %p145 = por %p143, %p144
      %p146 = scmp.ne.s32.totalorder %s135, %s138
      %p147 = scmp.eq.s32.totalorder %s20, 1
      %p148 = por %p146, %p147
      %p149 = scmp.ne.s32.totalorder %s138, %s139
      %p150 = scmp.eq.s32.totalorder %s20, 0
      %p151 = por %p149, %p150
      %p152 = scmp.ne.s32.totalorder %s138, %s139
      %p153 = scmp.eq.s32.totalorder %s21, 1
      %p154 = por %p152, %p153
      %p156 = scmp.ne.s32.totalorder %s139, %s155
      %p157 = scmp.eq.s32.totalorder %s21, 0
      %p158 = por %p156, %p157
      %p159 = scmp.le.s32.totalorder 1, %s15
      %p160 = scmp.lt.s32.totalorder %s15, 3
      %p161 = pnand %p159, %p160
      %p162 = pneg %p161
      // Predicated region
      $region9: #{tpu_custom_call.1} parent=5 // pred_check
        _
      $region10: #{tpu_custom_call.1} parent=5 // pred_check_branch
        %164 = sbr.rel (%p161) target = $region12
      $region11: #{tpu_custom_call.1} parent=5 // pred_region
        %s165 = ssub.s32 %s15, 1
        // Predicated region
        $region13: #{tpu_custom_call.1} parent=11 // pred_check
          %p166 = pneg %p62
        $region14: #{tpu_custom_call.1} parent=11 // pred_check_branch
          %168 = sbr.rel (%p166) target = $region16
        $region15: #{tpu_custom_call.1} parent=11 // pred_region
          _
        $region16: #{tpu_custom_call.1} parent=11 // pred_fallthru
          _
        // Predicated region
        $region17: #{tpu_custom_call.1} parent=11 // pred_check
          %p169 = pneg %p83
        $region18: #{tpu_custom_call.1} parent=11 // pred_check_branch
          %171 = sbr.rel (%p169) target = $region20
        $region19: #{tpu_custom_call.1} parent=11 // pred_region
          _
        $region20: #{tpu_custom_call.1} parent=11 // pred_fallthru
          _
        // Predicated region
        $region21: #{tpu_custom_call.1} parent=11 // pred_check
          %p172 = pneg %p104
        $region22: #{tpu_custom_call.1} parent=11 // pred_check_branch
          %174 = sbr.rel (%p172) target = $region24
        $region23: #{tpu_custom_call.1} parent=11 // pred_region
          _
        $region24: #{tpu_custom_call.1} parent=11 // pred_fallthru
          _
        // Predicated region
        $region25: #{tpu_custom_call.1} parent=11 // pred_check
          %p175 = pneg %p125
        $region26: #{tpu_custom_call.1} parent=11 // pred_check_branch
          %177 = sbr.rel (%p175) target = $region28
        $region27: #{tpu_custom_call.1} parent=11 // pred_region
          %s179 = ssub.s32 16, 16
          %180 = vsyncadd [#allocation5], %s179
          %s182 = sshll.u32 %s4, 4
          %s183 = int_to_ptr.vmem [resolvable:$true] %s182
          %185 = dma.vmem_to_smem %s183, 16, [#allocation3], [#allocation5]
        $region28: #{tpu_custom_call.1} parent=11 // pred_fallthru
          _
      $region12: #{tpu_custom_call.1} parent=5 // pred_fallthru
        _
      %p186 = scmp.lt.s32.totalorder %s15, 2
      // Predicated region
      $region29: #{tpu_custom_call.1} parent=5 // pred_check
        %p187 = pneg %p186
      $region30: #{tpu_custom_call.1} parent=5 // pred_check_branch
        %189 = sbr.rel (%p187) target = $region32
      $region31: #{tpu_custom_call.1} parent=5 // pred_region
        // Predicated region
        $region33: #{tpu_custom_call.1} parent=31 // pred_check
          %p190 = pneg %p35
        $region34: #{tpu_custom_call.1} parent=31 // pred_check_branch
          %192 = sbr.rel (%p190) target = $region36
        $region35: #{tpu_custom_call.1} parent=31 // pred_region
          %p193 = scmp.lt.s32.totalorder %s15, 1
          %s194 = scalar_select %p193, %s15, 1
          %s195 = smul.addr %s194, 2
          %s196 = smul.addr %s195, 4
          %s197 = scalar_lea.vmem %s0, %s196
        $region36: #{tpu_custom_call.1} parent=31 // pred_fallthru
          _
      $region32: #{tpu_custom_call.1} parent=5 // pred_fallthru
        _
      %p198 = scmp.le.s32.totalorder 1, %s15
      %p199 = scmp.lt.s32.totalorder %s15, 3
      %p200 = pnand %p198, %p199
      %p201 = pneg %p200
      // Predicated region
      $region37: #{tpu_custom_call.1} parent=5 // pred_check
        _
      $region38: #{tpu_custom_call.1} parent=5 // pred_check_branch
        %203 = sbr.rel (%p200) target = $region40
      $region39: #{tpu_custom_call.1} parent=5 // pred_region
        %s204 = ssub.s32 %s15, 1
        // Predicated region
        $region41: #{tpu_custom_call.1} parent=39 // pred_check
          %p205 = pneg %p125
        $region42: #{tpu_custom_call.1} parent=39 // pred_check_branch
          %207 = sbr.rel (%p205) target = $region44
        $region43: #{tpu_custom_call.1} parent=39 // pred_region
          %208 = dma.done [#allocation5], 16
        $region44: #{tpu_custom_call.1} parent=39 // pred_fallthru
          _
        %209 = sfence
        %p210 = scmp.lt.s32.totalorder %s20, 1
        %s211 = scalar_select %p210, %s20, 1
        %s212 = smul.addr %s211, 2
        %s213 = smul.addr %s212, 4
        %s214 = scalar_lea.vmem %s0, %s213
        %p215 = pneg %p41
        %p216 = pneg %p38
        %p217 = pneg %p62
        %p218 = pneg %p59
        %p219 = pneg %p83
        %p220 = pneg %p80
        %p221 = pneg %p104
        %p222 = pneg %p101
        %p223 = pneg %p125
        %p224 = pneg %p122
        %p225 = pneg %p151
        %p226 = pneg %p148
        %s227 = sand.u32 %s138, 1
        %s228 = scalar_lea.sflag [#allocation4], %s227
        %s229 = sand.u32 %s138, 1
        %s230 = smul.addr %s229, 16
        %s231 = scalar_lea.vmem [#allocation6], %s230
        %p232 = scmp.lt.s32.totalorder %s20, 1
        %s233 = scalar_select %p232, %s20, 1
        %s234 = smul.addr %s233, 2
        %s235 = smul.addr %s234, 4
        %s236 = scalar_lea.vmem %s0, %s235
        %v238 = vld [vmem:[%s236] sm:$0xf]
        %v239 = vld [vmem:[%s236 + $0x4] sm:$0xf]
        %v240 = vld [vmem:[%s1] sm:$0xf]
        %v241 = vld [vmem:[%s1 + $0x4] sm:$0xf]
        %v242 = vld [vmem:[%s1 + $0x8] sm:$0xf]
        %v243 = vld [vmem:[%s1 + $0xc] sm:$0xf]
        %v244 = vld [vmem:[%s1 + $0x10] sm:$0xf]
        %v245 = vld [vmem:[%s1 + $0x14] sm:$0xf]
        %v246 = vld [vmem:[%s1 + $0x18] sm:$0xf]
        %v247 = vld [vmem:[%s1 + $0x1c] sm:$0xf]
        %v248 = vld [vmem:[%s1 + $0x20] sm:$0xf]
        %v249 = vld [vmem:[%s1 + $0x24] sm:$0xf]
        %v250 = vld [vmem:[%s1 + $0x28] sm:$0xf]
        %v251 = vld [vmem:[%s1 + $0x2c] sm:$0xf]
        %v252 = vld [vmem:[%s1 + $0x30] sm:$0xf]
        %v253 = vld [vmem:[%s1 + $0x34] sm:$0xf]
        %v254 = vld [vmem:[%s1 + $0x38] sm:$0xf]
        %v255 = vld [vmem:[%s1 + $0x3c] sm:$0xf]
        %v256 = vld [vmem:[%s1 + $0x40] sm:$0xf]
        %v257 = vld [vmem:[%s1 + $0x44] sm:$0xf]
        %v258 = vld [vmem:[%s1 + $0x48] sm:$0xf]
        %v259 = vld [vmem:[%s1 + $0x4c] sm:$0xf]
        %v260 = vld [vmem:[%s1 + $0x50] sm:$0xf]
        %v261 = vld [vmem:[%s1 + $0x54] sm:$0xf]
        %v262 = vld [vmem:[%s1 + $0x58] sm:$0xf]
        %v263 = vld [vmem:[%s1 + $0x5c] sm:$0xf]
        %v288 = vunpack.c.l.b16 %v240
        %v289 = vunpack.c.l.b16 %v241
        %v290 = vunpack.c.l.b16 %v242
        %v291 = vunpack.c.l.b16 %v243
        %v292 = vunpack.c.l.b16 %v244
        %v293 = vunpack.c.l.b16 %v245
        %v294 = vunpack.c.l.b16 %v246
        %v295 = vunpack.c.l.b16 %v247
        %v296 = vunpack.c.l.b16 %v248
        %v297 = vunpack.c.l.b16 %v249
        %v298 = vunpack.c.l.b16 %v250
        %v299 = vunpack.c.l.b16 %v251
        %v300 = vunpack.c.l.b16 %v252
        %v301 = vunpack.c.l.b16 %v253
        %v302 = vunpack.c.l.b16 %v254
        %v303 = vunpack.c.l.b16 %v255
        %v304 = vunpack.c.l.b16 %v256
        %v305 = vunpack.c.l.b16 %v257
        %v306 = vunpack.c.l.b16 %v258
        %v307 = vunpack.c.l.b16 %v259
        %v308 = vunpack.c.l.b16 %v260
        %v309 = vunpack.c.l.b16 %v261
        %v310 = vunpack.c.l.b16 %v262
        %v311 = vunpack.c.l.b16 %v263
        %v312 = vpack.c.b16 %v289, %v288
        %v313 = vpack.c.b16 %v291, %v290
        %v314 = vpack.c.b16 %v293, %v292
        %v315 = vpack.c.b16 %v295, %v294
        %v316 = vpack.c.b16 %v297, %v296
        %v317 = vpack.c.b16 %v299, %v298
        %v318 = vpack.c.b16 %v301, %v300
        %v319 = vpack.c.b16 %v303, %v302
        %v320 = vpack.c.b16 %v305, %v304
        %v321 = vpack.c.b16 %v307, %v306
        %v322 = vpack.c.b16 %v309, %v308
        %v323 = vpack.c.b16 %v311, %v310
        %v326 = vunpack.c.l.b16 %v238
        %v327 = vunpack.c.l.b16 %v239
        %v328 = vpack.c.b16 %v327, %v326
        %vm329 = vcmask 523264
        %v331 = vsel %vm329, %v312, 0
        %v334 = vsel %vm329, %v313, 0
        %v337 = vsel %vm329, %v314, 0
        %v340 = vsel %vm329, %v315, 0
        %v343 = vsel %vm329, %v316, 0
        %v346 = vsel %vm329, %v317, 0
        %v349 = vsel %vm329, %v318, 0
        %v352 = vsel %vm329, %v319, 0
        %v355 = vsel %vm329, %v320, 0
        %v358 = vsel %vm329, %v321, 0
        %v361 = vsel %vm329, %v322, 0
        %v364 = vsel %vm329, %v323, 0
        %v367 = vsel %vm329, %v328, 0
        %369 = vmatprep.subr.bf16.mxu0 0
        %370 = vmatpush1.bf16.xpose.msra.mxu0 %v367
        %371 = vmatprep.subr.bf16.mxu0 0
        %372 = vmatpush1.bf16.xpose.msra.mxu0 0
        %373 = vmatprep.subr.bf16.mxu0 0
        %374 = vmatpush1.bf16.xpose.msra.mxu0 0
        %375 = vmatprep.subr.bf16.mxu0 0
        %376 = vmatpush1.bf16.xpose.msra.mxu0 0
        %377 = vmatprep.subr.bf16.mxu0 0
        %378 = vmatpush1.bf16.xpose.msra.mxu0 0
        %379 = vmatprep.subr.bf16.mxu0 0
        %380 = vmatpush1.bf16.xpose.msra.mxu0 0
        %381 = vmatprep.subr.bf16.mxu0 0
        %382 = vmatpush1.bf16.xpose.msra.mxu0 0
        %383 = vmatprep.subr.bf16.mxu0 0
        %384 = vmatpush1.bf16.xpose.msra.mxu0 0
        %385 = vmatprep.subr.bf16.mxu0 0
        %386 = vmatpush1.bf16.xpose.msra.mxu0 0
        %387 = vmatprep.subr.bf16.mxu0 0
        %388 = vmatpush1.bf16.xpose.msra.mxu0 0
        %389 = vmatprep.subr.bf16.mxu0 0
        %390 = vmatpush1.bf16.xpose.msra.mxu0 0
        %391 = vmatprep.subr.bf16.mxu0 0
        %392 = vmatpush1.bf16.xpose.msra.mxu0 0
        %393 = vmatprep.subr.bf16.mxu0 0
        %394 = vmatpush1.bf16.xpose.msra.mxu0 0
        %395 = vmatprep.subr.bf16.mxu0 0
        %396 = vmatpush1.bf16.xpose.msra.mxu0 0
        %397 = vmatprep.subr.bf16.mxu0 0
        %398 = vmatpush1.bf16.xpose.msra.mxu0 0
        %399 = vmatprep.subr.bf16.mxu0 0
        %400 = vmatpush1.bf16.xpose.msra.mxu0 0
        %401 = vmatprep.mubr.bf16.mxu0 0
        %402 = vmatmul.mubr.bf16.gmra.mrb[0].mxu0 %v331
        %v403 = vpop.f32.mrb[0].mxu0
        %v404 = vadd.f32 0.0, %v403
        %v405 = vpop.f32.mrb[0].mxu0
        %v406 = vpop.f32.mrb[0].mxu0
        %v407 = vadd.f32 0.0, %v406
        %v408 = vpop.f32.mrb[0].mxu0
        %409 = vmatprep.mubr.bf16.mxu0 0
        %410 = vmatmul.mubr.bf16.gmra.mrb[0].mxu0 %v334
        %v411 = vpop.f32.mrb[0].mxu0
        %v412 = vadd.f32 0.0, %v411
        %v413 = vpop.f32.mrb[0].mxu0
        %v414 = vpop.f32.mrb[0].mxu0
        %v415 = vadd.f32 0.0, %v414
        %v416 = vpop.f32.mrb[0].mxu0
        %417 = vmatprep.mubr.bf16.mxu0 0
        %418 = vmatmul.mubr.bf16.gmra.mrb[0].mxu0 %v337
        %v419 = vpop.f32.mrb[0].mxu0
        %v420 = vadd.f32 0.0, %v419
        %v421 = vpop.f32.mrb[0].mxu0
        %v422 = vpop.f32.mrb[0].mxu0
        %v423 = vadd.f32 0.0, %v422
        %v424 = vpop.f32.mrb[0].mxu0
        %425 = vmatprep.mubr.bf16.mxu0 0
        %426 = vmatmul.mubr.bf16.gmra.mrb[0].mxu0 %v340
        %v427 = vpop.f32.mrb[0].mxu0
        %v428 = vadd.f32 0.0, %v427
        %v429 = vpop.f32.mrb[0].mxu0
        %v430 = vpop.f32.mrb[0].mxu0
        %v431 = vadd.f32 0.0, %v430
        %v432 = vpop.f32.mrb[0].mxu0
        %433 = vmatprep.mubr.bf16.mxu0 0
        %434 = vmatmul.mubr.bf16.gmra.mrb[0].mxu0 %v343
        %v435 = vpop.f32.mrb[0].mxu0
        %v436 = vadd.f32 0.0, %v435
        %v437 = vpop.f32.mrb[0].mxu0
        %v438 = vpop.f32.mrb[0].mxu0
        %v439 = vadd.f32 0.0, %v438
        %v440 = vpop.f32.mrb[0].mxu0
        %441 = vmatprep.mubr.bf16.mxu0 0
        %442 = vmatmul.mubr.bf16.gmra.mrb[0].mxu0 %v346
        %v443 = vpop.f32.mrb[0].mxu0
        %v444 = vadd.f32 0.0, %v443
        %v445 = vpop.f32.mrb[0].mxu0
        %v446 = vpop.f32.mrb[0].mxu0
        %v447 = vadd.f32 0.0, %v446
        %v448 = vpop.f32.mrb[0].mxu0
        %449 = vmatprep.mubr.bf16.mxu0 0
        %450 = vmatmul.mubr.bf16.gmra.mrb[0].mxu0 %v349
        %v451 = vpop.f32.mrb[0].mxu0
        %v452 = vadd.f32 0.0, %v451
        %v453 = vpop.f32.mrb[0].mxu0
        %v454 = vpop.f32.mrb[0].mxu0
        %v455 = vadd.f32 0.0, %v454
        %v456 = vpop.f32.mrb[0].mxu0
        %457 = vmatprep.mubr.bf16.mxu0 0
        %458 = vmatmul.mubr.bf16.gmra.mrb[0].mxu0 %v352
        %v459 = vpop.f32.mrb[0].mxu0
        %v460 = vadd.f32 0.0, %v459
        %v461 = vpop.f32.mrb[0].mxu0
        %v462 = vpop.f32.mrb[0].mxu0
        %v463 = vadd.f32 0.0, %v462
        %v464 = vpop.f32.mrb[0].mxu0
        %465 = vmatprep.mubr.bf16.mxu0 0
        %466 = vmatmul.mubr.bf16.gmra.mrb[0].mxu0 %v355
        %v467 = vpop.f32.mrb[0].mxu0
        %v468 = vadd.f32 0.0, %v467
        %v469 = vpop.f32.mrb[0].mxu0
        %v470 = vpop.f32.mrb[0].mxu0
        %v471 = vadd.f32 0.0, %v470
        %v472 = vpop.f32.mrb[0].mxu0
        %473 = vmatprep.mubr.bf16.mxu0 0
        %474 = vmatmul.mubr.bf16.gmra.mrb[0].mxu0 %v358
        %v475 = vpop.f32.mrb[0].mxu0
        %v476 = vadd.f32 0.0, %v475
        %v477 = vpop.f32.mrb[0].mxu0
        %v478 = vpop.f32.mrb[0].mxu0
        %v479 = vadd.f32 0.0, %v478
        %v480 = vpop.f32.mrb[0].mxu0
        %481 = vmatprep.mubr.bf16.mxu0 0
        %482 = vmatmul.mubr.bf16.gmra.mrb[0].mxu0 %v361
        %v483 = vpop.f32.mrb[0].mxu0
        %v484 = vadd.f32 0.0, %v483
        %v485 = vpop.f32.mrb[0].mxu0
        %v486 = vpop.f32.mrb[0].mxu0
        %v487 = vadd.f32 0.0, %v486
        %v488 = vpop.f32.mrb[0].mxu0
        %489 = vmatprep.mubr.bf16.mxu0 0
        %490 = vmatmul.mubr.bf16.gmra.mrb[0].mxu0 %v364
        %v491 = vpop.f32.mrb[0].mxu0
        %v492 = vadd.f32 0.0, %v491
        %v493 = vpop.f32.mrb[0].mxu0
        %v494 = vpop.f32.mrb[0].mxu0
        %v495 = vadd.f32 0.0, %v494
        %v496 = vpop.f32.mrb[0].mxu0
        %497 = vdwg.mxu0
        %v498 = vmul.f32 %v404, %v404
        %v499 = vmul.f32 %v407, %v407
        %v500 = vmul.f32 %v412, %v412
        %v501 = vmul.f32 %v415, %v415
        %v502 = vmul.f32 %v420, %v420
        %v503 = vmul.f32 %v423, %v423
        %v504 = vmul.f32 %v428, %v428
        %v505 = vmul.f32 %v431, %v431
        %vm506 = vcmask 130048
        %v507 = vsel %vm506, %v498, 0.0
        %508 = vadd.xlane.f32.xlu0 %v507
        %v509 = vpop.xlane.xlu0 %508
        %v510 = vsel %vm506, %v499, 0.0
        %511 = vadd.xlane.f32.xlu0 %v510
        %v512 = vpop.xlane.xlu0 %511
        %v513 = vsel %vm506, %v500, 0.0
        %514 = vadd.xlane.f32.xlu0 %v513
        %v515 = vpop.xlane.xlu0 %514
        %v516 = vsel %vm506, %v501, 0.0
        %517 = vadd.xlane.f32.xlu0 %v516
        %v518 = vpop.xlane.xlu0 %517
        %v519 = vsel %vm506, %v502, 0.0
        %520 = vadd.xlane.f32.xlu0 %v519
        %v521 = vpop.xlane.xlu0 %520
        %v522 = vsel %vm506, %v503, 0.0
        %523 = vadd.xlane.f32.xlu0 %v522
        %v524 = vpop.xlane.xlu0 %523
        %v525 = vsel %vm506, %v504, 0.0
        %526 = vadd.xlane.f32.xlu0 %v525
        %v527 = vpop.xlane.xlu0 %526
        %v528 = vsel %vm506, %v505, 0.0
        %529 = vadd.xlane.f32.xlu0 %v528
        %v530 = vpop.xlane.xlu0 %529
        %v531 = vmax.f32 %v509, 1e-24
        %v532 = vmax.f32 %v512, 1e-24
        %v533 = vmax.f32 %v515, 1e-24
        %v534 = vmax.f32 %v518, 1e-24
        %v535 = vmax.f32 %v521, 1e-24
        %v536 = vmax.f32 %v524, 1e-24
        %v537 = vmax.f32 %v527, 1e-24
        %v538 = vmax.f32 %v530, 1e-24
        %v539 = vrsqrt.pop %v531
        %v540 = vrsqrt.pop %v532
        %v541 = vrsqrt.pop %v533
        %v542 = vrsqrt.pop %v534
        %v543 = vrsqrt.pop %v535
        %v544 = vrsqrt.pop %v536
        %v545 = vrsqrt.pop %v537
        %v546 = vrsqrt.pop %v538
        %v547 = vmul.f32 %v404, %v539
        %v548 = vmul.f32 %v407, %v540
        %v549 = vmul.f32 %v412, %v541
        %v550 = vmul.f32 %v415, %v542
        %v551 = vmul.f32 %v420, %v543
        %v552 = vmul.f32 %v423, %v544
        %v553 = vmul.f32 %v428, %v545
        %v554 = vmul.f32 %v431, %v546
        %v555 = vmul.f32 %v436, %v436
        %v556 = vmul.f32 %v439, %v439
        %v557 = vmul.f32 %v444, %v444
        %v558 = vmul.f32 %v447, %v447
        %v559 = vmul.f32 %v452, %v452
        %v560 = vmul.f32 %v455, %v455
        %v561 = vmul.f32 %v460, %v460
        %v562 = vmul.f32 %v463, %v463
        %v563 = vsel %vm506, %v555, 0.0
        %564 = vadd.xlane.f32.xlu0 %v563
        %v565 = vpop.xlane.xlu0 %564
        %v566 = vsel %vm506, %v556, 0.0
        %567 = vadd.xlane.f32.xlu0 %v566
        %v568 = vpop.xlane.xlu0 %567
        %v569 = vsel %vm506, %v557, 0.0
        %570 = vadd.xlane.f32.xlu0 %v569
        %v571 = vpop.xlane.xlu0 %570
        %v572 = vsel %vm506, %v558, 0.0
        %573 = vadd.xlane.f32.xlu0 %v572
        %v574 = vpop.xlane.xlu0 %573
        %v575 = vsel %vm506, %v559, 0.0
        %576 = vadd.xlane.f32.xlu0 %v575
        %v577 = vpop.xlane.xlu0 %576
        %v578 = vsel %vm506, %v560, 0.0
        %579 = vadd.xlane.f32.xlu0 %v578
        %v580 = vpop.xlane.xlu0 %579
        %v581 = vsel %vm506, %v561, 0.0
        %582 = vadd.xlane.f32.xlu0 %v581
        %v583 = vpop.xlane.xlu0 %582
        %v584 = vsel %vm506, %v562, 0.0
        %585 = vadd.xlane.f32.xlu0 %v584
        %v586 = vpop.xlane.xlu0 %585
        %v587 = vmax.f32 %v565, 1e-24
        %v588 = vmax.f32 %v568, 1e-24
        %v589 = vmax.f32 %v571, 1e-24
        %v590 = vmax.f32 %v574, 1e-24
        %v591 = vmax.f32 %v577, 1e-24
        %v592 = vmax.f32 %v580, 1e-24
        %v593 = vmax.f32 %v583, 1e-24
        %v594 = vmax.f32 %v586, 1e-24
        %v595 = vrsqrt.pop %v587
        %v596 = vrsqrt.pop %v588
        %v597 = vrsqrt.pop %v589
        %v598 = vrsqrt.pop %v590
        %v599 = vrsqrt.pop %v591
        %v600 = vrsqrt.pop %v592
        %v601 = vrsqrt.pop %v593
        %v602 = vrsqrt.pop %v594
        %v603 = vmul.f32 %v436, %v595
        %v604 = vmul.f32 %v439, %v596
        %v605 = vmul.f32 %v444, %v597
        %v606 = vmul.f32 %v447, %v598
        %v607 = vmul.f32 %v452, %v599
        %v608 = vmul.f32 %v455, %v600
        %v609 = vmul.f32 %v460, %v601
        %v610 = vmul.f32 %v463, %v602
        %v611 = vpack.c.bf16 %v547, %v547
        %v612 = vpack.c.bf16 %v603, %v603
        %v613 = vpack.c.bf16 %v468, %v468
        %v615 = vsel %vm506, %v611, 0
        %v618 = vsel %vm506, %v612, 0
        %620 = vmatprep.subr.bf16.mxu0 0
        %621 = vmatpush1.bf16.xpose.msra.mxu0 %v618
        %622 = vmatprep.subr.bf16.mxu0 0
        %623 = vmatpush1.bf16.xpose.msra.mxu0 0
        %624 = vmatprep.subr.bf16.mxu0 0
        %625 = vmatpush1.bf16.xpose.msra.mxu0 0
        %626 = vmatprep.subr.bf16.mxu0 0
        %627 = vmatpush1.bf16.xpose.msra.mxu0 0
        %628 = vmatprep.subr.bf16.mxu0 0
        %629 = vmatpush1.bf16.xpose.msra.mxu0 0
        %630 = vmatprep.subr.bf16.mxu0 0
        %631 = vmatpush1.bf16.xpose.msra.mxu0 0
        %632 = vmatprep.subr.bf16.mxu0 0
        %633 = vmatpush1.bf16.xpose.msra.mxu0 0
        %634 = vmatprep.subr.bf16.mxu0 0
        %635 = vmatpush1.bf16.xpose.msra.mxu0 0
        %636 = vmatprep.subr.bf16.mxu0 0
        %637 = vmatpush1.bf16.xpose.msra.mxu0 0
        %638 = vmatprep.subr.bf16.mxu0 0
        %639 = vmatpush1.bf16.xpose.msra.mxu0 0
        %640 = vmatprep.subr.bf16.mxu0 0
        %641 = vmatpush1.bf16.xpose.msra.mxu0 0
        %642 = vmatprep.subr.bf16.mxu0 0
        %643 = vmatpush1.bf16.xpose.msra.mxu0 0
        %644 = vmatprep.subr.bf16.mxu0 0
        %645 = vmatpush1.bf16.xpose.msra.mxu0 0
        %646 = vmatprep.subr.bf16.mxu0 0
        %647 = vmatpush1.bf16.xpose.msra.mxu0 0
        %648 = vmatprep.subr.bf16.mxu0 0
        %649 = vmatpush1.bf16.xpose.msra.mxu0 0
        %650 = vmatprep.subr.bf16.mxu0 0
        %651 = vmatpush1.bf16.xpose.msra.mxu0 0
        %652 = vmatprep.mubr.bf16.mxu0 0
        %653 = vmatmul.mubr.bf16.gmra.mrb[0].mxu0 %v615
        %v654 = vpop.f32.mrb[0].mxu0
        %v655 = vadd.f32 0.0, %v654
        %v656 = vpop.f32.mrb[0].mxu0
        %v657 = vpop.f32.mrb[0].mxu0
        %v658 = vpop.f32.mrb[0].mxu0
        %659 = vdwg.mxu0
        %s660 = sld [smem:[#allocation3]]
        %v661 = vstv %s660
        %v662 = vmul.f32 %v655, %v661
        %vm663 = vcmask 64512
        %v664 = vsel %vm663, %v662, -inf
        %665 = vmax.xlane.f32.xlu0 %v664
        %v666 = vpop.xlane.xlu0 %665
        %v667 = vsub.f32 %v662, %v666
        %v668 = vmul.f32 %v667, 1.442695
        %v669 = vpow.pop %v668
        %v670 = vsel %vm663, %v669, 0.0
        %671 = vadd.xlane.f32.xlu0 %v670
        %v672 = vpop.xlane.xlu0 %671
        %v673 = vrcp.pop %v672
        %v674 = vmul.f32 %v669, %v673
        %v675 = vpack.c.bf16 %v674, %v674
        %v677 = vsel %vm663, %v675, 0
        %vm679 = vcmask 1043456
        %v681 = vsel %vm679, %v613, 0
        %683 = vmatprep.subr.bf16.mxu0 0
        %684 = vmatpush1.bf16.msra.mxu0 %v681
        %685 = vmatprep.subr.bf16.mxu0 0
        %686 = vmatpush1.bf16.msra.mxu0 0
        %687 = vmatprep.subr.bf16.mxu0 0
        %688 = vmatpush1.bf16.msra.mxu0 0
        %689 = vmatprep.subr.bf16.mxu0 0
        %690 = vmatpush1.bf16.msra.mxu0 0
        %691 = vmatprep.subr.bf16.mxu0 0
        %692 = vmatpush1.bf16.msra.mxu0 0
        %693 = vmatprep.subr.bf16.mxu0 0
        %694 = vmatpush1.bf16.msra.mxu0 0
        %695 = vmatprep.subr.bf16.mxu0 0
        %696 = vmatpush1.bf16.msra.mxu0 0
        %697 = vmatprep.subr.bf16.mxu0 0
        %698 = vmatpush1.bf16.msra.mxu0 0
        %699 = vmatprep.subr.bf16.mxu0 0
        %700 = vmatpush1.bf16.msra.mxu0 0
        %701 = vmatprep.subr.bf16.mxu0 0
        %702 = vmatpush1.bf16.msra.mxu0 0
        %703 = vmatprep.subr.bf16.mxu0 0
        %704 = vmatpush1.bf16.msra.mxu0 0
        %705 = vmatprep.subr.bf16.mxu0 0
        %706 = vmatpush1.bf16.msra.mxu0 0
        %707 = vmatprep.subr.bf16.mxu0 0
        %708 = vmatpush1.bf16.msra.mxu0 0
        %709 = vmatprep.subr.bf16.mxu0 0
        %710 = vmatpush1.bf16.msra.mxu0 0
        %711 = vmatprep.subr.bf16.mxu0 0
        %712 = vmatpush1.bf16.msra.mxu0 0
        %713 = vmatprep.subr.bf16.mxu0 0
        %714 = vmatpush1.bf16.msra.mxu0 0
        %715 = vmatprep.mubr.bf16.mxu0 0
        %716 = vmatmul.mubr.bf16.gmra.mrb[0].mxu0 %v677
        %v717 = vpop.f32.mrb[0].mxu0
        %v718 = vadd.f32 0.0, %v717
        %v719 = vpop.f32.mrb[0].mxu0
        %v720 = vpop.f32.mrb[0].mxu0
        %v721 = vpop.f32.mrb[0].mxu0
        %722 = vdwg.mxu0
        %723 = vst.msk [vmem:[#allocation2] sm:$0xff] %vm506, %v718
        %v724 = vpack.c.bf16 %v548, %v548
        %v725 = vpack.c.bf16 %v604, %v604
        %v726 = vpack.c.bf16 %v471, %v471
        %v728 = vsel %vm506, %v724, 0
        %v731 = vsel %vm506, %v725, 0
        %733 = vmatprep.subr.bf16.mxu0 0
        %734 = vmatpush1.bf16.xpose.msra.mxu0 %v731
        %735 = vmatprep.subr.bf16.mxu0 0
        %736 = vmatpush1.bf16.xpose.msra.mxu0 0
        %737 = vmatprep.subr.bf16.mxu0 0
        %738 = vmatpush1.bf16.xpose.msra.mxu0 0
        %739 = vmatprep.subr.bf16.mxu0 0
        %740 = vmatpush1.bf16.xpose.msra.mxu0 0
        %741 = vmatprep.subr.bf16.mxu0 0
        %742 = vmatpush1.bf16.xpose.msra.mxu0 0
        %743 = vmatprep.subr.bf16.mxu0 0
        %744 = vmatpush1.bf16.xpose.msra.mxu0 0
        %745 = vmatprep.subr.bf16.mxu0 0
        %746 = vmatpush1.bf16.xpose.msra.mxu0 0
        %747 = vmatprep.subr.bf16.mxu0 0
        %748 = vmatpush1.bf16.xpose.msra.mxu0 0
        %749 = vmatprep.subr.bf16.mxu0 0
        %750 = vmatpush1.bf16.xpose.msra.mxu0 0
        %751 = vmatprep.subr.bf16.mxu0 0
        %752 = vmatpush1.bf16.xpose.msra.mxu0 0
        %753 = vmatprep.subr.bf16.mxu0 0
        %754 = vmatpush1.bf16.xpose.msra.mxu0 0
        %755 = vmatprep.subr.bf16.mxu0 0
        %756 = vmatpush1.bf16.xpose.msra.mxu0 0
        %757 = vmatprep.subr.bf16.mxu0 0
        %758 = vmatpush1.bf16.xpose.msra.mxu0 0
        %759 = vmatprep.subr.bf16.mxu0 0
        %760 = vmatpush1.bf16.xpose.msra.mxu0 0
        %761 = vmatprep.subr.bf16.mxu0 0
        %762 = vmatpush1.bf16.xpose.msra.mxu0 0
        %763 = vmatprep.subr.bf16.mxu0 0
        %764 = vmatpush1.bf16.xpose.msra.mxu0 0
        %765 = vmatprep.mubr.bf16.mxu0 0
        %766 = vmatmul.mubr.bf16.gmra.mrb[0].mxu0 %v728
        %v767 = vpop.f32.mrb[0].mxu0
        %v768 = vadd.f32 0.0, %v767
        %v769 = vpop.f32.mrb[0].mxu0
        %v770 = vpop.f32.mrb[0].mxu0
        %v771 = vpop.f32.mrb[0].mxu0
        %772 = vdwg.mxu0
        %s773 = sld [smem:[#allocation3 + $0x1]]
        %v774 = vstv %s773
        %v775 = vmul.f32 %v768, %v774
        %v776 = vsel %vm663, %v775, -inf
        %777 = vmax.xlane.f32.xlu0 %v776
        %v778 = vpop.xlane.xlu0 %777
        %v779 = vsub.f32 %v775, %v778
        %v780 = vmul.f32 %v779, 1.442695
        %v781 = vpow.pop %v780
        %v782 = vsel %vm663, %v781, 0.0
        %783 = vadd.xlane.f32.xlu0 %v782
        %v784 = vpop.xlane.xlu0 %783
        %v785 = vrcp.pop %v784
        %v786 = vmul.f32 %v781, %v785
        %v787 = vpack.c.bf16 %v786, %v786
        %v789 = vsel %vm663, %v787, 0
        %v792 = vsel %vm679, %v726, 0
        %794 = vmatprep.subr.bf16.mxu0 0
        %795 = vmatpush1.bf16.msra.mxu0 %v792
        %796 = vmatprep.subr.bf16.mxu0 0
        %797 = vmatpush1.bf16.msra.mxu0 0
        %798 = vmatprep.subr.bf16.mxu0 0
        %799 = vmatpush1.bf16.msra.mxu0 0
        %800 = vmatprep.subr.bf16.mxu0 0
        %801 = vmatpush1.bf16.msra.mxu0 0
        %802 = vmatprep.subr.bf16.mxu0 0
        %803 = vmatpush1.bf16.msra.mxu0 0
        %804 = vmatprep.subr.bf16.mxu0 0
        %805 = vmatpush1.bf16.msra.mxu0 0
        %806 = vmatprep.subr.bf16.mxu0 0
        %807 = vmatpush1.bf16.msra.mxu0 0
        %808 = vmatprep.subr.bf16.mxu0 0
        %809 = vmatpush1.bf16.msra.mxu0 0
        %810 = vmatprep.subr.bf16.mxu0 0
        %811 = vmatpush1.bf16.msra.mxu0 0
        %812 = vmatprep.subr.bf16.mxu0 0
        %813 = vmatpush1.bf16.msra.mxu0 0
        %814 = vmatprep.subr.bf16.mxu0 0
        %815 = vmatpush1.bf16.msra.mxu0 0
        %816 = vmatprep.subr.bf16.mxu0 0
        %817 = vmatpush1.bf16.msra.mxu0 0
        %818 = vmatprep.subr.bf16.mxu0 0
        %819 = vmatpush1.bf16.msra.mxu0 0
        %820 = vmatprep.subr.bf16.mxu0 0
        %821 = vmatpush1.bf16.msra.mxu0 0
        %822 = vmatprep.subr.bf16.mxu0 0
        %823 = vmatpush1.bf16.msra.mxu0 0
        %824 = vmatprep.subr.bf16.mxu0 0
        %825 = vmatpush1.bf16.msra.mxu0 0
        %826 = vmatprep.mubr.bf16.mxu0 0
        %827 = vmatmul.mubr.bf16.gmra.mrb[0].mxu0 %v789
        %v828 = vpop.f32.mrb[0].mxu0
        %v829 = vadd.f32 0.0, %v828
        %v830 = vpop.f32.mrb[0].mxu0
        %v831 = vpop.f32.mrb[0].mxu0
        %v832 = vpop.f32.mrb[0].mxu0
        %833 = vdwg.mxu0
        %834 = vst.msk [vmem:[#allocation2 + $0x8] sm:$0xff] %vm506, %v829
        %v835 = vpack.c.bf16 %v549, %v549
        %v836 = vpack.c.bf16 %v605, %v605
        %v837 = vpack.c.bf16 %v476, %v476
        %v839 = vsel %vm506, %v835, 0
        %v842 = vsel %vm506, %v836, 0
        %844 = vmatprep.subr.bf16.mxu0 0
        %845 = vmatpush1.bf16.xpose.msra.mxu0 %v842
        %846 = vmatprep.subr.bf16.mxu0 0
        %847 = vmatpush1.bf16.xpose.msra.mxu0 0
        %848 = vmatprep.subr.bf16.mxu0 0
        %849 = vmatpush1.bf16.xpose.msra.mxu0 0
        %850 = vmatprep.subr.bf16.mxu0 0
        %851 = vmatpush1.bf16.xpose.msra.mxu0 0
        %852 = vmatprep.subr.bf16.mxu0 0
        %853 = vmatpush1.bf16.xpose.msra.mxu0 0
        %854 = vmatprep.subr.bf16.mxu0 0
        %855 = vmatpush1.bf16.xpose.msra.mxu0 0
        %856 = vmatprep.subr.bf16.mxu0 0
        %857 = vmatpush1.bf16.xpose.msra.mxu0 0
        %858 = vmatprep.subr.bf16.mxu0 0
        %859 = vmatpush1.bf16.xpose.msra.mxu0 0
        %860 = vmatprep.subr.bf16.mxu0 0
        %861 = vmatpush1.bf16.xpose.msra.mxu0 0
        %862 = vmatprep.subr.bf16.mxu0 0
        %863 = vmatpush1.bf16.xpose.msra.mxu0 0
        %864 = vmatprep.subr.bf16.mxu0 0
        %865 = vmatpush1.bf16.xpose.msra.mxu0 0
        %866 = vmatprep.subr.bf16.mxu0 0
        %867 = vmatpush1.bf16.xpose.msra.mxu0 0
        %868 = vmatprep.subr.bf16.mxu0 0
        %869 = vmatpush1.bf16.xpose.msra.mxu0 0
        %870 = vmatprep.subr.bf16.mxu0 0
        %871 = vmatpush1.bf16.xpose.msra.mxu0 0
        %872 = vmatprep.subr.bf16.mxu0 0
        %873 = vmatpush1.bf16.xpose.msra.mxu0 0
        %874 = vmatprep.subr.bf16.mxu0 0
        %875 = vmatpush1.bf16.xpose.msra.mxu0 0
        %876 = vmatprep.mubr.bf16.mxu0 0
        %877 = vmatmul.mubr.bf16.gmra.mrb[0].mxu0 %v839
        %v878 = vpop.f32.mrb[0].mxu0
        %v879 = vadd.f32 0.0, %v878
        %v880 = vpop.f32.mrb[0].mxu0
        %v881 = vpop.f32.mrb[0].mxu0
        %v882 = vpop.f32.mrb[0].mxu0
        %883 = vdwg.mxu0
        %s884 = sld [smem:[#allocation3 + $0x2]]
        %v885 = vstv %s884
        %v886 = vmul.f32 %v879, %v885
        %v887 = vsel %vm663, %v886, -inf
        %888 = vmax.xlane.f32.xlu0 %v887
        %v889 = vpop.xlane.xlu0 %888
        %v890 = vsub.f32 %v886, %v889
        %v891 = vmul.f32 %v890, 1.442695
        %v892 = vpow.pop %v891
        %v893 = vsel %vm663, %v892, 0.0
        %894 = vadd.xlane.f32.xlu0 %v893
        %v895 = vpop.xlane.xlu0 %894
        %v896 = vrcp.pop %v895
        %v897 = vmul.f32 %v892, %v896
        %v898 = vpack.c.bf16 %v897, %v897
        %v900 = vsel %vm663, %v898, 0
        %v903 = vsel %vm679, %v837, 0
        %905 = vmatprep.subr.bf16.mxu0 0
        %906 = vmatpush1.bf16.msra.mxu0 %v903
        %907 = vmatprep.subr.bf16.mxu0 0
        %908 = vmatpush1.bf16.msra.mxu0 0
        %909 = vmatprep.subr.bf16.mxu0 0
        %910 = vmatpush1.bf16.msra.mxu0 0
        %911 = vmatprep.subr.bf16.mxu0 0
        %912 = vmatpush1.bf16.msra.mxu0 0
        %913 = vmatprep.subr.bf16.mxu0 0
        %914 = vmatpush1.bf16.msra.mxu0 0
        %915 = vmatprep.subr.bf16.mxu0 0
        %916 = vmatpush1.bf16.msra.mxu0 0
        %917 = vmatprep.subr.bf16.mxu0 0
        %918 = vmatpush1.bf16.msra.mxu0 0
        %919 = vmatprep.subr.bf16.mxu0 0
        %920 = vmatpush1.bf16.msra.mxu0 0
        %921 = vmatprep.subr.bf16.mxu0 0
        %922 = vmatpush1.bf16.msra.mxu0 0
        %923 = vmatprep.subr.bf16.mxu0 0
        %924 = vmatpush1.bf16.msra.mxu0 0
        %925 = vmatprep.subr.bf16.mxu0 0
        %926 = vmatpush1.bf16.msra.mxu0 0
        %927 = vmatprep.subr.bf16.mxu0 0
        %928 = vmatpush1.bf16.msra.mxu0 0
        %929 = vmatprep.subr.bf16.mxu0 0
        %930 = vmatpush1.bf16.msra.mxu0 0
        %931 = vmatprep.subr.bf16.mxu0 0
        %932 = vmatpush1.bf16.msra.mxu0 0
        %933 = vmatprep.subr.bf16.mxu0 0
        %934 = vmatpush1.bf16.msra.mxu0 0
        %935 = vmatprep.subr.bf16.mxu0 0
        %936 = vmatpush1.bf16.msra.mxu0 0
        %937 = vmatprep.mubr.bf16.mxu0 0
        %938 = vmatmul.mubr.bf16.gmra.mrb[0].mxu0 %v900
        %v939 = vpop.f32.mrb[0].mxu0
        %v940 = vadd.f32 0.0, %v939
        %v941 = vpop.f32.mrb[0].mxu0
        %v942 = vpop.f32.mrb[0].mxu0
        %v943 = vpop.f32.mrb[0].mxu0
        %944 = vdwg.mxu0
        %945 = vst.msk [vmem:[#allocation2 + $0x10] sm:$0xff] %vm506, %v940
        %v946 = vpack.c.bf16 %v550, %v550
        %v947 = vpack.c.bf16 %v606, %v606
        %v948 = vpack.c.bf16 %v479, %v479
        %v950 = vsel %vm506, %v946, 0
        %v953 = vsel %vm506, %v947, 0
        %955 = vmatprep.subr.bf16.mxu0 0
        %956 = vmatpush1.bf16.xpose.msra.mxu0 %v953
        %957 = vmatprep.subr.bf16.mxu0 0
        %958 = vmatpush1.bf16.xpose.msra.mxu0 0
        %959 = vmatprep.subr.bf16.mxu0 0
        %960 = vmatpush1.bf16.xpose.msra.mxu0 0
        %961 = vmatprep.subr.bf16.mxu0 0
        %962 = vmatpush1.bf16.xpose.msra.mxu0 0
        %963 = vmatprep.subr.bf16.mxu0 0
        %964 = vmatpush1.bf16.xpose.msra.mxu0 0
        %965 = vmatprep.subr.bf16.mxu0 0
        %966 = vmatpush1.bf16.xpose.msra.mxu0 0
        %967 = vmatprep.subr.bf16.mxu0 0
        %968 = vmatpush1.bf16.xpose.msra.mxu0 0
        %969 = vmatprep.subr.bf16.mxu0 0
        %970 = vmatpush1.bf16.xpose.msra.mxu0 0
        %971 = vmatprep.subr.bf16.mxu0 0
        %972 = vmatpush1.bf16.xpose.msra.mxu0 0
        %973 = vmatprep.subr.bf16.mxu0 0
        %974 = vmatpush1.bf16.xpose.msra.mxu0 0
        %975 = vmatprep.subr.bf16.mxu0 0
        %976 = vmatpush1.bf16.xpose.msra.mxu0 0
        %977 = vmatprep.subr.bf16.mxu0 0
        %978 = vmatpush1.bf16.xpose.msra.mxu0 0
        %979 = vmatprep.subr.bf16.mxu0 0
        %980 = vmatpush1.bf16.xpose.msra.mxu0 0
        %981 = vmatprep.subr.bf16.mxu0 0
        %982 = vmatpush1.bf16.xpose.msra.mxu0 0
        %983 = vmatprep.subr.bf16.mxu0 0
        %984 = vmatpush1.bf16.xpose.msra.mxu0 0
        %985 = vmatprep.subr.bf16.mxu0 0
        %986 = vmatpush1.bf16.xpose.msra.mxu0 0
        %987 = vmatprep.mubr.bf16.mxu0 0
        %988 = vmatmul.mubr.bf16.gmra.mrb[0].mxu0 %v950
        %v989 = vpop.f32.mrb[0].mxu0
        %v990 = vadd.f32 0.0, %v989
        %v991 = vpop.f32.mrb[0].mxu0
        %v992 = vpop.f32.mrb[0].mxu0
        %v993 = vpop.f32.mrb[0].mxu0
        %994 = vdwg.mxu0
        %s995 = sld [smem:[#allocation3 + $0x3]]
        %v996 = vstv %s995
        %v997 = vmul.f32 %v990, %v996
        %v998 = vsel %vm663, %v997, -inf
        %999 = vmax.xlane.f32.xlu0 %v998
        %v1000 = vpop.xlane.xlu0 %999
        %v1001 = vsub.f32 %v997, %v1000
        %v1002 = vmul.f32 %v1001, 1.442695
        %v1003 = vpow.pop %v1002
        %v1004 = vsel %vm663, %v1003, 0.0
        %1005 = vadd.xlane.f32.xlu0 %v1004
        %v1006 = vpop.xlane.xlu0 %1005
        %v1007 = vrcp.pop %v1006
        %v1008 = vmul.f32 %v1003, %v1007
        %v1009 = vpack.c.bf16 %v1008, %v1008
        %v1011 = vsel %vm663, %v1009, 0
        %v1014 = vsel %vm679, %v948, 0
        %1016 = vmatprep.subr.bf16.mxu0 0
        %1017 = vmatpush1.bf16.msra.mxu0 %v1014
        %1018 = vmatprep.subr.bf16.mxu0 0
        %1019 = vmatpush1.bf16.msra.mxu0 0
        %1020 = vmatprep.subr.bf16.mxu0 0
        %1021 = vmatpush1.bf16.msra.mxu0 0
        %1022 = vmatprep.subr.bf16.mxu0 0
        %1023 = vmatpush1.bf16.msra.mxu0 0
        %1024 = vmatprep.subr.bf16.mxu0 0
        %1025 = vmatpush1.bf16.msra.mxu0 0
        %1026 = vmatprep.subr.bf16.mxu0 0
        %1027 = vmatpush1.bf16.msra.mxu0 0
        %1028 = vmatprep.subr.bf16.mxu0 0
        %1029 = vmatpush1.bf16.msra.mxu0 0
        %1030 = vmatprep.subr.bf16.mxu0 0
        %1031 = vmatpush1.bf16.msra.mxu0 0
        %1032 = vmatprep.subr.bf16.mxu0 0
        %1033 = vmatpush1.bf16.msra.mxu0 0
        %1034 = vmatprep.subr.bf16.mxu0 0
        %1035 = vmatpush1.bf16.msra.mxu0 0
        %1036 = vmatprep.subr.bf16.mxu0 0
        %1037 = vmatpush1.bf16.msra.mxu0 0
        %1038 = vmatprep.subr.bf16.mxu0 0
        %1039 = vmatpush1.bf16.msra.mxu0 0
        %1040 = vmatprep.subr.bf16.mxu0 0
        %1041 = vmatpush1.bf16.msra.mxu0 0
        %1042 = vmatprep.subr.bf16.mxu0 0
        %1043 = vmatpush1.bf16.msra.mxu0 0
        %1044 = vmatprep.subr.bf16.mxu0 0
        %1045 = vmatpush1.bf16.msra.mxu0 0
        %1046 = vmatprep.subr.bf16.mxu0 0
        %1047 = vmatpush1.bf16.msra.mxu0 0
        %1048 = vmatprep.mubr.bf16.mxu0 0
        %1049 = vmatmul.mubr.bf16.gmra.mrb[0].mxu0 %v1011
        %v1050 = vpop.f32.mrb[0].mxu0
        %v1051 = vadd.f32 0.0, %v1050
        %v1052 = vpop.f32.mrb[0].mxu0
        %v1053 = vpop.f32.mrb[0].mxu0
        %v1054 = vpop.f32.mrb[0].mxu0
        %1055 = vdwg.mxu0
        %1056 = vst.msk [vmem:[#allocation2 + $0x18] sm:$0xff] %vm506, %v1051
        %v1057 = vpack.c.bf16 %v551, %v551
        %v1058 = vpack.c.bf16 %v607, %v607
        %v1059 = vpack.c.bf16 %v484, %v484
        %v1061 = vsel %vm506, %v1057, 0
        %v1064 = vsel %vm506, %v1058, 0
        %1066 = vmatprep.subr.bf16.mxu0 0
        %1067 = vmatpush1.bf16.xpose.msra.mxu0 %v1064
        %1068 = vmatprep.subr.bf16.mxu0 0
        %1069 = vmatpush1.bf16.xpose.msra.mxu0 0
        %1070 = vmatprep.subr.bf16.mxu0 0
        %1071 = vmatpush1.bf16.xpose.msra.mxu0 0
        %1072 = vmatprep.subr.bf16.mxu0 0
        %1073 = vmatpush1.bf16.xpose.msra.mxu0 0
        %1074 = vmatprep.subr.bf16.mxu0 0
        %1075 = vmatpush1.bf16.xpose.msra.mxu0 0
        %1076 = vmatprep.subr.bf16.mxu0 0
        %1077 = vmatpush1.bf16.xpose.msra.mxu0 0
        %1078 = vmatprep.subr.bf16.mxu0 0
        %1079 = vmatpush1.bf16.xpose.msra.mxu0 0
        %1080 = vmatprep.subr.bf16.mxu0 0
        %1081 = vmatpush1.bf16.xpose.msra.mxu0 0
        %1082 = vmatprep.subr.bf16.mxu0 0
        %1083 = vmatpush1.bf16.xpose.msra.mxu0 0
        %1084 = vmatprep.subr.bf16.mxu0 0
        %1085 = vmatpush1.bf16.xpose.msra.mxu0 0
        %1086 = vmatprep.subr.bf16.mxu0 0
        %1087 = vmatpush1.bf16.xpose.msra.mxu0 0
        %1088 = vmatprep.subr.bf16.mxu0 0
        %1089 = vmatpush1.bf16.xpose.msra.mxu0 0
        %1090 = vmatprep.subr.bf16.mxu0 0
        %1091 = vmatpush1.bf16.xpose.msra.mxu0 0
        %1092 = vmatprep.subr.bf16.mxu0 0
        %1093 = vmatpush1.bf16.xpose.msra.mxu0 0
        %1094 = vmatprep.subr.bf16.mxu0 0
        %1095 = vmatpush1.bf16.xpose.msra.mxu0 0
        %1096 = vmatprep.subr.bf16.mxu0 0
        %1097 = vmatpush1.bf16.xpose.msra.mxu0 0
        %1098 = vmatprep.mubr.bf16.mxu0 0
        %1099 = vmatmul.mubr.bf16.gmra.mrb[0].mxu0 %v1061
        %v1100 = vpop.f32.mrb[0].mxu0
        %v1101 = vadd.f32 0.0, %v1100
        %v1102 = vpop.f32.mrb[0].mxu0
        %v1103 = vpop.f32.mrb[0].mxu0
        %v1104 = vpop.f32.mrb[0].mxu0
        %1105 = vdwg.mxu0
        %s1106 = sld [smem:[#allocation3 + $0x4]]
        %v1107 = vstv %s1106
        %v1108 = vmul.f32 %v1101, %v1107
        %v1109 = vsel %vm663, %v1108, -inf
        %1110 = vmax.xlane.f32.xlu0 %v1109
        %v1111 = vpop.xlane.xlu0 %1110
        %v1112 = vsub.f32 %v1108, %v1111
        %v1113 = vmul.f32 %v1112, 1.442695
        %v1114 = vpow.pop %v1113
        %v1115 = vsel %vm663, %v1114, 0.0
        %1116 = vadd.xlane.f32.xlu0 %v1115
        %v1117 = vpop.xlane.xlu0 %1116
        %v1118 = vrcp.pop %v1117
        %v1119 = vmul.f32 %v1114, %v1118
        %v1120 = vpack.c.bf16 %v1119, %v1119
        %v1122 = vsel %vm663, %v1120, 0
        %v1125 = vsel %vm679, %v1059, 0
        %1127 = vmatprep.subr.bf16.mxu0 0
        %1128 = vmatpush1.bf16.msra.mxu0 %v1125
        %1129 = vmatprep.subr.bf16.mxu0 0
        %1130 = vmatpush1.bf16.msra.mxu0 0
        %1131 = vmatprep.subr.bf16.mxu0 0
        %1132 = vmatpush1.bf16.msra.mxu0 0
        %1133 = vmatprep.subr.bf16.mxu0 0
        %1134 = vmatpush1.bf16.msra.mxu0 0
        %1135 = vmatprep.subr.bf16.mxu0 0
        %1136 = vmatpush1.bf16.msra.mxu0 0
        %1137 = vmatprep.subr.bf16.mxu0 0
        %1138 = vmatpush1.bf16.msra.mxu0 0
        %1139 = vmatprep.subr.bf16.mxu0 0
        %1140 = vmatpush1.bf16.msra.mxu0 0
        %1141 = vmatprep.subr.bf16.mxu0 0
        %1142 = vmatpush1.bf16.msra.mxu0 0
        %1143 = vmatprep.subr.bf16.mxu0 0
        %1144 = vmatpush1.bf16.msra.mxu0 0
        %1145 = vmatprep.subr.bf16.mxu0 0
        %1146 = vmatpush1.bf16.msra.mxu0 0
        %1147 = vmatprep.subr.bf16.mxu0 0
        %1148 = vmatpush1.bf16.msra.mxu0 0
        %1149 = vmatprep.subr.bf16.mxu0 0
        %1150 = vmatpush1.bf16.msra.mxu0 0
        %1151 = vmatprep.subr.bf16.mxu0 0
        %1152 = vmatpush1.bf16.msra.mxu0 0
        %1153 = vmatprep.subr.bf16.mxu0 0
        %1154 = vmatpush1.bf16.msra.mxu0 0
        %1155 = vmatprep.subr.bf16.mxu0 0
        %1156 = vmatpush1.bf16.msra.mxu0 0
        %1157 = vmatprep.subr.bf16.mxu0 0
        %1158 = vmatpush1.bf16.msra.mxu0 0
        %1159 = vmatprep.mubr.bf16.mxu0 0
        %1160 = vmatmul.mubr.bf16.gmra.mrb[0].mxu0 %v1122
        %v1161 = vpop.f32.mrb[0].mxu0
        %v1162 = vadd.f32 0.0, %v1161
        %v1163 = vpop.f32.mrb[0].mxu0
        %v1164 = vpop.f32.mrb[0].mxu0
        %v1165 = vpop.f32.mrb[0].mxu0
        %1166 = vdwg.mxu0
        %1167 = vst.msk [vmem:[#allocation2 + $0x20] sm:$0xff] %vm506, %v1162
        %v1168 = vpack.c.bf16 %v552, %v552
        %v1169 = vpack.c.bf16 %v608, %v608
        %v1170 = vpack.c.bf16 %v487, %v487
        %v1172 = vsel %vm506, %v1168, 0
        %v1175 = vsel %vm506, %v1169, 0
        %1177 = vmatprep.subr.bf16.mxu0 0
        %1178 = vmatpush1.bf16.xpose.msra.mxu0 %v1175
        %1179 = vmatprep.subr.bf16.mxu0 0
        %1180 = vmatpush1.bf16.xpose.msra.mxu0 0
        %1181 = vmatprep.subr.bf16.mxu0 0
        %1182 = vmatpush1.bf16.xpose.msra.mxu0 0
        %1183 = vmatprep.subr.bf16.mxu0 0
        %1184 = vmatpush1.bf16.xpose.msra.mxu0 0
        %1185 = vmatprep.subr.bf16.mxu0 0
        %1186 = vmatpush1.bf16.xpose.msra.mxu0 0
        %1187 = vmatprep.subr.bf16.mxu0 0
        %1188 = vmatpush1.bf16.xpose.msra.mxu0 0
        %1189 = vmatprep.subr.bf16.mxu0 0
        %1190 = vmatpush1.bf16.xpose.msra.mxu0 0
        %1191 = vmatprep.subr.bf16.mxu0 0
        %1192 = vmatpush1.bf16.xpose.msra.mxu0 0
        %1193 = vmatprep.subr.bf16.mxu0 0
        %1194 = vmatpush1.bf16.xpose.msra.mxu0 0
        %1195 = vmatprep.subr.bf16.mxu0 0
        %1196 = vmatpush1.bf16.xpose.msra.mxu0 0
        %1197 = vmatprep.subr.bf16.mxu0 0
        %1198 = vmatpush1.bf16.xpose.msra.mxu0 0
        %1199 = vmatprep.subr.bf16.mxu0 0
        %1200 = vmatpush1.bf16.xpose.msra.mxu0 0
        %1201 = vmatprep.subr.bf16.mxu0 0
        %1202 = vmatpush1.bf16.xpose.msra.mxu0 0
        %1203 = vmatprep.subr.bf16.mxu0 0
        %1204 = vmatpush1.bf16.xpose.msra.mxu0 0
        %1205 = vmatprep.subr.bf16.mxu0 0
        %1206 = vmatpush1.bf16.xpose.msra.mxu0 0
        %1207 = vmatprep.subr.bf16.mxu0 0
        %1208 = vmatpush1.bf16.xpose.msra.mxu0 0
        %1209 = vmatprep.mubr.bf16.mxu0 0
        %1210 = vmatmul.mubr.bf16.gmra.mrb[0].mxu0 %v1172
        %v1211 = vpop.f32.mrb[0].mxu0
        %v1212 = vadd.f32 0.0, %v1211
        %v1213 = vpop.f32.mrb[0].mxu0
        %v1214 = vpop.f32.mrb[0].mxu0
        %v1215 = vpop.f32.mrb[0].mxu0
        %1216 = vdwg.mxu0
        %s1217 = sld [smem:[#allocation3 + $0x5]]
        %v1218 = vstv %s1217
        %v1219 = vmul.f32 %v1212, %v1218
        %v1220 = vsel %vm663, %v1219, -inf
        %1221 = vmax.xlane.f32.xlu0 %v1220
        %v1222 = vpop.xlane.xlu0 %1221
        %v1223 = vsub.f32 %v1219, %v1222
        %v1224 = vmul.f32 %v1223, 1.442695
        %v1225 = vpow.pop %v1224
        %v1226 = vsel %vm663, %v1225, 0.0
        %1227 = vadd.xlane.f32.xlu0 %v1226
        %v1228 = vpop.xlane.xlu0 %1227
        %v1229 = vrcp.pop %v1228
        %v1230 = vmul.f32 %v1225, %v1229
        %v1231 = vpack.c.bf16 %v1230, %v1230
        %v1233 = vsel %vm663, %v1231, 0
        %v1236 = vsel %vm679, %v1170, 0
        %1238 = vmatprep.subr.bf16.mxu0 0
        %1239 = vmatpush1.bf16.msra.mxu0 %v1236
        %1240 = vmatprep.subr.bf16.mxu0 0
        %1241 = vmatpush1.bf16.msra.mxu0 0
        %1242 = vmatprep.subr.bf16.mxu0 0
        %1243 = vmatpush1.bf16.msra.mxu0 0
        %1244 = vmatprep.subr.bf16.mxu0 0
        %1245 = vmatpush1.bf16.msra.mxu0 0
        %1246 = vmatprep.subr.bf16.mxu0 0
        %1247 = vmatpush1.bf16.msra.mxu0 0
        %1248 = vmatprep.subr.bf16.mxu0 0
        %1249 = vmatpush1.bf16.msra.mxu0 0
        %1250 = vmatprep.subr.bf16.mxu0 0
        %1251 = vmatpush1.bf16.msra.mxu0 0
        %1252 = vmatprep.subr.bf16.mxu0 0
        %1253 = vmatpush1.bf16.msra.mxu0 0
        %1254 = vmatprep.subr.bf16.mxu0 0
        %1255 = vmatpush1.bf16.msra.mxu0 0
        %1256 = vmatprep.subr.bf16.mxu0 0
        %1257 = vmatpush1.bf16.msra.mxu0 0
        %1258 = vmatprep.subr.bf16.mxu0 0
        %1259 = vmatpush1.bf16.msra.mxu0 0
        %1260 = vmatprep.subr.bf16.mxu0 0
        %1261 = vmatpush1.bf16.msra.mxu0 0
        %1262 = vmatprep.subr.bf16.mxu0 0
        %1263 = vmatpush1.bf16.msra.mxu0 0
        %1264 = vmatprep.subr.bf16.mxu0 0
        %1265 = vmatpush1.bf16.msra.mxu0 0
        %1266 = vmatprep.subr.bf16.mxu0 0
        %1267 = vmatpush1.bf16.msra.mxu0 0
        %1268 = vmatprep.subr.bf16.mxu0 0
        %1269 = vmatpush1.bf16.msra.mxu0 0
        %1270 = vmatprep.mubr.bf16.mxu0 0
        %1271 = vmatmul.mubr.bf16.gmra.mrb[0].mxu0 %v1233
        %v1272 = vpop.f32.mrb[0].mxu0
        %v1273 = vadd.f32 0.0, %v1272
        %v1274 = vpop.f32.mrb[0].mxu0
        %v1275 = vpop.f32.mrb[0].mxu0
        %v1276 = vpop.f32.mrb[0].mxu0
        %1277 = vdwg.mxu0
        %1278 = vst.msk [vmem:[#allocation2 + $0x28] sm:$0xff] %vm506, %v1273
        %v1279 = vpack.c.bf16 %v553, %v553
        %v1280 = vpack.c.bf16 %v609, %v609
        %v1281 = vpack.c.bf16 %v492, %v492
        %v1283 = vsel %vm506, %v1279, 0
        %v1286 = vsel %vm506, %v1280, 0
        %1288 = vmatprep.subr.bf16.mxu0 0
        %1289 = vmatpush1.bf16.xpose.msra.mxu0 %v1286
        %1290 = vmatprep.subr.bf16.mxu0 0
        %1291 = vmatpush1.bf16.xpose.msra.mxu0 0
        %1292 = vmatprep.subr.bf16.mxu0 0
        %1293 = vmatpush1.bf16.xpose.msra.mxu0 0
        %1294 = vmatprep.subr.bf16.mxu0 0
        %1295 = vmatpush1.bf16.xpose.msra.mxu0 0
        %1296 = vmatprep.subr.bf16.mxu0 0
        %1297 = vmatpush1.bf16.xpose.msra.mxu0 0
        %1298 = vmatprep.subr.bf16.mxu0 0
        %1299 = vmatpush1.bf16.xpose.msra.mxu0 0
        %1300 = vmatprep.subr.bf16.mxu0 0
        %1301 = vmatpush1.bf16.xpose.msra.mxu0 0
        %1302 = vmatprep.subr.bf16.mxu0 0
        %1303 = vmatpush1.bf16.xpose.msra.mxu0 0
        %1304 = vmatprep.subr.bf16.mxu0 0
        %1305 = vmatpush1.bf16.xpose.msra.mxu0 0
        %1306 = vmatprep.subr.bf16.mxu0 0
        %1307 = vmatpush1.bf16.xpose.msra.mxu0 0
        %1308 = vmatprep.subr.bf16.mxu0 0
        %1309 = vmatpush1.bf16.xpose.msra.mxu0 0
        %1310 = vmatprep.subr.bf16.mxu0 0
        %1311 = vmatpush1.bf16.xpose.msra.mxu0 0
        %1312 = vmatprep.subr.bf16.mxu0 0
        %1313 = vmatpush1.bf16.xpose.msra.mxu0 0
        %1314 = vmatprep.subr.bf16.mxu0 0
        %1315 = vmatpush1.bf16.xpose.msra.mxu0 0
        %1316 = vmatprep.subr.bf16.mxu0 0
        %1317 = vmatpush1.bf16.xpose.msra.mxu0 0
        %1318 = vmatprep.subr.bf16.mxu0 0
        %1319 = vmatpush1.bf16.xpose.msra.mxu0 0
        %1320 = vmatprep.mubr.bf16.mxu0 0
        %1321 = vmatmul.mubr.bf16.gmra.mrb[0].mxu0 %v1283
        %v1322 = vpop.f32.mrb[0].mxu0
        %v1323 = vadd.f32 0.0, %v1322
        %v1324 = vpop.f32.mrb[0].mxu0
        %v1325 = vpop.f32.mrb[0].mxu0
        %v1326 = vpop.f32.mrb[0].mxu0
        %1327 = vdwg.mxu0
        %s1328 = sld [smem:[#allocation3 + $0x6]]
        %v1329 = vstv %s1328
        %v1330 = vmul.f32 %v1323, %v1329
        %v1331 = vsel %vm663, %v1330, -inf
        %1332 = vmax.xlane.f32.xlu0 %v1331
        %v1333 = vpop.xlane.xlu0 %1332
        %v1334 = vsub.f32 %v1330, %v1333
        %v1335 = vmul.f32 %v1334, 1.442695
        %v1336 = vpow.pop %v1335
        %v1337 = vsel %vm663, %v1336, 0.0
        %1338 = vadd.xlane.f32.xlu0 %v1337
        %v1339 = vpop.xlane.xlu0 %1338
        %v1340 = vrcp.pop %v1339
        %v1341 = vmul.f32 %v1336, %v1340
        %v1342 = vpack.c.bf16 %v1341, %v1341
        %v1344 = vsel %vm663, %v1342, 0
        %v1347 = vsel %vm679, %v1281, 0
        %1349 = vmatprep.subr.bf16.mxu0 0
        %1350 = vmatpush1.bf16.msra.mxu0 %v1347
        %1351 = vmatprep.subr.bf16.mxu0 0
        %1352 = vmatpush1.bf16.msra.mxu0 0
        %1353 = vmatprep.subr.bf16.mxu0 0
        %1354 = vmatpush1.bf16.msra.mxu0 0
        %1355 = vmatprep.subr.bf16.mxu0 0
        %1356 = vmatpush1.bf16.msra.mxu0 0
        %1357 = vmatprep.subr.bf16.mxu0 0
        %1358 = vmatpush1.bf16.msra.mxu0 0
        %1359 = vmatprep.subr.bf16.mxu0 0
        %1360 = vmatpush1.bf16.msra.mxu0 0
        %1361 = vmatprep.subr.bf16.mxu0 0
        %1362 = vmatpush1.bf16.msra.mxu0 0
        %1363 = vmatprep.subr.bf16.mxu0 0
        %1364 = vmatpush1.bf16.msra.mxu0 0
        %1365 = vmatprep.subr.bf16.mxu0 0
        %1366 = vmatpush1.bf16.msra.mxu0 0
        %1367 = vmatprep.subr.bf16.mxu0 0
        %1368 = vmatpush1.bf16.msra.mxu0 0
        %1369 = vmatprep.subr.bf16.mxu0 0
        %1370 = vmatpush1.bf16.msra.mxu0 0
        %1371 = vmatprep.subr.bf16.mxu0 0
        %1372 = vmatpush1.bf16.msra.mxu0 0
        %1373 = vmatprep.subr.bf16.mxu0 0
        %1374 = vmatpush1.bf16.msra.mxu0 0
        %1375 = vmatprep.subr.bf16.mxu0 0
        %1376 = vmatpush1.bf16.msra.mxu0 0
        %1377 = vmatprep.subr.bf16.mxu0 0
        %1378 = vmatpush1.bf16.msra.mxu0 0
        %1379 = vmatprep.subr.bf16.mxu0 0
        %1380 = vmatpush1.bf16.msra.mxu0 0
        %1381 = vmatprep.mubr.bf16.mxu0 0
        %1382 = vmatmul.mubr.bf16.gmra.mrb[0].mxu0 %v1344
        %v1383 = vpop.f32.mrb[0].mxu0
        %v1384 = vadd.f32 0.0, %v1383
        %v1385 = vpop.f32.mrb[0].mxu0
        %v1386 = vpop.f32.mrb[0].mxu0
        %v1387 = vpop.f32.mrb[0].mxu0
        %1388 = vdwg.mxu0
        %1389 = vst.msk [vmem:[#allocation2 + $0x30] sm:$0xff] %vm506, %v1384
        %v1390 = vpack.c.bf16 %v554, %v554
        %v1391 = vpack.c.bf16 %v610, %v610
        %v1392 = vpack.c.bf16 %v495, %v495
        %v1394 = vsel %vm506, %v1390, 0
        %v1397 = vsel %vm506, %v1391, 0
        %1399 = vmatprep.subr.bf16.mxu0 0
        %1400 = vmatpush1.bf16.xpose.msra.mxu0 %v1397
        %1401 = vmatprep.subr.bf16.mxu0 0
        %1402 = vmatpush1.bf16.xpose.msra.mxu0 0
        %1403 = vmatprep.subr.bf16.mxu0 0
        %1404 = vmatpush1.bf16.xpose.msra.mxu0 0
        %1405 = vmatprep.subr.bf16.mxu0 0
        %1406 = vmatpush1.bf16.xpose.msra.mxu0 0
        %1407 = vmatprep.subr.bf16.mxu0 0
        %1408 = vmatpush1.bf16.xpose.msra.mxu0 0
        %1409 = vmatprep.subr.bf16.mxu0 0
        %1410 = vmatpush1.bf16.xpose.msra.mxu0 0
        %1411 = vmatprep.subr.bf16.mxu0 0
        %1412 = vmatpush1.bf16.xpose.msra.mxu0 0
        %1413 = vmatprep.subr.bf16.mxu0 0
        %1414 = vmatpush1.bf16.xpose.msra.mxu0 0
        %1415 = vmatprep.subr.bf16.mxu0 0
        %1416 = vmatpush1.bf16.xpose.msra.mxu0 0
        %1417 = vmatprep.subr.bf16.mxu0 0
        %1418 = vmatpush1.bf16.xpose.msra.mxu0 0
        %1419 = vmatprep.subr.bf16.mxu0 0
        %1420 = vmatpush1.bf16.xpose.msra.mxu0 0
        %1421 = vmatprep.subr.bf16.mxu0 0
        %1422 = vmatpush1.bf16.xpose.msra.mxu0 0
        %1423 = vmatprep.subr.bf16.mxu0 0
        %1424 = vmatpush1.bf16.xpose.msra.mxu0 0
        %1425 = vmatprep.subr.bf16.mxu0 0
        %1426 = vmatpush1.bf16.xpose.msra.mxu0 0
        %1427 = vmatprep.subr.bf16.mxu0 0
        %1428 = vmatpush1.bf16.xpose.msra.mxu0 0
        %1429 = vmatprep.subr.bf16.mxu0 0
        %1430 = vmatpush1.bf16.xpose.msra.mxu0 0
        %1431 = vmatprep.mubr.bf16.mxu0 0
        %1432 = vmatmul.mubr.bf16.gmra.mrb[0].mxu0 %v1394
        %v1433 = vpop.f32.mrb[0].mxu0
        %v1434 = vadd.f32 0.0, %v1433
        %v1435 = vpop.f32.mrb[0].mxu0
        %v1436 = vpop.f32.mrb[0].mxu0
        %v1437 = vpop.f32.mrb[0].mxu0
        %1438 = vdwg.mxu0
        %s1439 = sld [smem:[#allocation3 + $0x7]]
        %v1440 = vstv %s1439
        %v1441 = vmul.f32 %v1434, %v1440
        %v1442 = vsel %vm663, %v1441, -inf
        %1443 = vmax.xlane.f32.xlu0 %v1442
        %v1444 = vpop.xlane.xlu0 %1443
        %v1445 = vsub.f32 %v1441, %v1444
        %v1446 = vmul.f32 %v1445, 1.442695
        %v1447 = vpow.pop %v1446
        %v1448 = vsel %vm663, %v1447, 0.0
        %1449 = vadd.xlane.f32.xlu0 %v1448
        %v1450 = vpop.xlane.xlu0 %1449
        %v1451 = vrcp.pop %v1450
        %v1452 = vmul.f32 %v1447, %v1451
        %v1453 = vpack.c.bf16 %v1452, %v1452
        %v1455 = vsel %vm663, %v1453, 0
        %v1458 = vsel %vm679, %v1392, 0
        %1460 = vmatprep.subr.bf16.mxu0 0
        %1461 = vmatpush1.bf16.msra.mxu0 %v1458
        %1462 = vmatprep.subr.bf16.mxu0 0
        %1463 = vmatpush1.bf16.msra.mxu0 0
        %1464 = vmatprep.subr.bf16.mxu0 0
        %1465 = vmatpush1.bf16.msra.mxu0 0
        %1466 = vmatprep.subr.bf16.mxu0 0
        %1467 = vmatpush1.bf16.msra.mxu0 0
        %1468 = vmatprep.subr.bf16.mxu0 0
        %1469 = vmatpush1.bf16.msra.mxu0 0
        %1470 = vmatprep.subr.bf16.mxu0 0
        %1471 = vmatpush1.bf16.msra.mxu0 0
        %1472 = vmatprep.subr.bf16.mxu0 0
        %1473 = vmatpush1.bf16.msra.mxu0 0
        %1474 = vmatprep.subr.bf16.mxu0 0
        %1475 = vmatpush1.bf16.msra.mxu0 0
        %1476 = vmatprep.subr.bf16.mxu0 0
        %1477 = vmatpush1.bf16.msra.mxu0 0
        %1478 = vmatprep.subr.bf16.mxu0 0
        %1479 = vmatpush1.bf16.msra.mxu0 0
        %1480 = vmatprep.subr.bf16.mxu0 0
        %1481 = vmatpush1.bf16.msra.mxu0 0
        %1482 = vmatprep.subr.bf16.mxu0 0
        %1483 = vmatpush1.bf16.msra.mxu0 0
        %1484 = vmatprep.subr.bf16.mxu0 0
        %1485 = vmatpush1.bf16.msra.mxu0 0
        %1486 = vmatprep.subr.bf16.mxu0 0
        %1487 = vmatpush1.bf16.msra.mxu0 0
        %1488 = vmatprep.subr.bf16.mxu0 0
        %1489 = vmatpush1.bf16.msra.mxu0 0
        %1490 = vmatprep.subr.bf16.mxu0 0
        %1491 = vmatpush1.bf16.msra.mxu0 0
        %1492 = vmatprep.mubr.bf16.mxu0 0
        %1493 = vmatmul.mubr.bf16.gmra.mrb[0].mxu0 %v1455
        %v1494 = vpop.f32.mrb[0].mxu0
        %v1495 = vadd.f32 0.0, %v1494
        %v1496 = vpop.f32.mrb[0].mxu0
        %v1497 = vpop.f32.mrb[0].mxu0
        %v1498 = vpop.f32.mrb[0].mxu0
        %1499 = vdwg.mxu0
        %1500 = vst.msk [vmem:[#allocation2 + $0x38] sm:$0xff] %vm506, %v1495
        %v1501 = vld [vmem:[#allocation2] sm:$0xff]
        %v1502 = vld [vmem:[#allocation2 + $0x8] sm:$0xff]
        %v1503 = vld [vmem:[#allocation2 + $0x10] sm:$0xff]
        %v1504 = vld [vmem:[#allocation2 + $0x18] sm:$0xff]
        %v1505 = vld [vmem:[#allocation2 + $0x20] sm:$0xff]
        %v1506 = vld [vmem:[#allocation2 + $0x28] sm:$0xff]
        %v1507 = vld [vmem:[#allocation2 + $0x30] sm:$0xff]
        %v1508 = vld [vmem:[#allocation2 + $0x38] sm:$0xff]
        %v1509 = vld [vmem:[%s2] sm:$0xff]
        %v1510 = vld [vmem:[%s2 + $0x8] sm:$0xff]
        %v1511 = vld [vmem:[%s2 + $0x10] sm:$0xff]
        %v1512 = vld [vmem:[%s2 + $0x18] sm:$0xff]
        %v1513 = vld [vmem:[%s2 + $0x20] sm:$0xff]
        %v1514 = vld [vmem:[%s2 + $0x28] sm:$0xff]
        %v1515 = vld [vmem:[%s2 + $0x30] sm:$0xff]
        %v1516 = vld [vmem:[%s2 + $0x38] sm:$0xff]
        %v1517 = vld [vmem:[%s3] sm:$0x1]
        %v1519 = vlaneseq
        %v1520 = vshrl.u32 %v1519, 7
        %v1521 = vsub.s32 0, %v1520
        %v1522 = vrot.slane %v1517, %v1521
        %1524 = vxpose.xlu0.b32.start [1/16] %v1501, 128
        %1525 = vxpose.xlu0.b32.cont [2/16] %v1502, 128
        %1526 = vxpose.xlu0.b32.cont [3/16] %v1503, 128
        %1527 = vxpose.xlu0.b32.cont [4/16] %v1504, 128
        %1528 = vxpose.xlu0.b32.cont [5/16] %v1505, 128
        %1529 = vxpose.xlu0.b32.cont [6/16] %v1506, 128
        %1530 = vxpose.xlu0.b32.cont [7/16] %v1507, 128
        %1531 = vxpose.xlu0.b32.cont [8/16] %v1508, 128
        %1532 = vxpose.xlu0.b32.cont [9/16] 0.0, 128
        %1533 = vxpose.xlu0.b32.cont [10/16] 0.0, 128
        %1534 = vxpose.xlu0.b32.cont [11/16] 0.0, 128
        %1535 = vxpose.xlu0.b32.cont [12/16] 0.0, 128
        %1536 = vxpose.xlu0.b32.cont [13/16] 0.0, 128
        %1537 = vxpose.xlu0.b32.cont [14/16] 0.0, 128
        %1538 = vxpose.xlu0.b32.cont [15/16] 0.0, 128
        %1539 = vxpose.xlu0.b32.end [16/16] 0.0, 128
        %v1540 = vpop.trf.xlu0
        %v1541 = vpop.trf.xlu0
        %v1542 = vpop.trf.xlu0
        %v1543 = vpop.trf.xlu0
        %v1544 = vpop.trf.xlu0
        %v1545 = vpop.trf.xlu0
        %v1546 = vpop.trf.xlu0
        %v1547 = vpop.trf.xlu0
        %v1548 = vpop.trf.xlu0
        %v1549 = vpop.trf.xlu0
        %v1550 = vpop.trf.xlu0
        %v1551 = vpop.trf.xlu0
        %v1552 = vpop.trf.xlu0
        %v1553 = vpop.trf.xlu0
        %v1554 = vpop.trf.xlu0
        %v1555 = vpop.trf.xlu0
        %v1557 = vsel %vm329, %v1540, 0
        %v1560 = vsel %vm329, %v1541, 0
        %1562 = vmatprep.subr.mxu0 0.0
        %1563 = vmatpush1.msra.mxu0 %v1509
        %1564 = vmatprep.subr.mxu0 0.0
        %1565 = vmatpush1.msra.mxu0 %v1510
        %1566 = vmatprep.subr.mxu0 0.0
        %1567 = vmatpush1.msra.mxu0 %v1511
        %1568 = vmatprep.subr.mxu0 0.0
        %1569 = vmatpush1.msra.mxu0 %v1512
        %1570 = vmatprep.subr.mxu0 0.0
        %1571 = vmatpush1.msra.mxu0 %v1513
        %1572 = vmatprep.subr.mxu0 0.0
        %1573 = vmatpush1.msra.mxu0 %v1514
        %1574 = vmatprep.subr.mxu0 0.0
        %1575 = vmatpush1.msra.mxu0 %v1515
        %1576 = vmatprep.subr.mxu0 0.0
        %1577 = vmatpush1.msra.mxu0 %v1516
        %1578 = vmatprep.subr.mxu0 0.0
        %1579 = vmatpush1.msra.mxu0 0.0
        %1580 = vmatprep.subr.mxu0 0.0
        %1581 = vmatpush1.msra.mxu0 0.0
        %1582 = vmatprep.subr.mxu0 0.0
        %1583 = vmatpush1.msra.mxu0 0.0
        %1584 = vmatprep.subr.mxu0 0.0
        %1585 = vmatpush1.msra.mxu0 0.0
        %1586 = vmatprep.subr.mxu0 0.0
        %1587 = vmatpush1.msra.mxu0 0.0
        %1588 = vmatprep.subr.mxu0 0.0
        %1589 = vmatpush1.msra.mxu0 0.0
        %1590 = vmatprep.subr.mxu0 0.0
        %1591 = vmatpush1.msra.mxu0 0.0
        %1592 = vmatprep.subr.mxu0 0.0
        %1593 = vmatpush1.msra.mxu0 0.0
        %1594 = vmatprep.subr.mxu0 0.0
        %1595 = vmatpush1.msra.mxu0 0.0
        %1596 = vmatprep.subr.mxu0 0.0
        %1597 = vmatpush1.msra.mxu0 0.0
        %1598 = vmatprep.subr.mxu0 0.0
        %1599 = vmatpush1.msra.mxu0 0.0
        %1600 = vmatprep.subr.mxu0 0.0
        %1601 = vmatpush1.msra.mxu0 0.0
        %1602 = vmatprep.subr.mxu0 0.0
        %1603 = vmatpush1.msra.mxu0 0.0
        %1604 = vmatprep.subr.mxu0 0.0
        %1605 = vmatpush1.msra.mxu0 0.0
        %1606 = vmatprep.subr.mxu0 0.0
        %1607 = vmatpush1.msra.mxu0 0.0
        %1608 = vmatprep.subr.mxu0 0.0
        %1609 = vmatpush1.msra.mxu0 0.0
        %1610 = vmatprep.subr.mxu0 0.0
        %1611 = vmatpush1.msra.mxu0 0.0
        %1612 = vmatprep.subr.mxu0 0.0
        %1613 = vmatpush1.msra.mxu0 0.0
        %1614 = vmatprep.subr.mxu0 0.0
        %1615 = vmatpush1.msra.mxu0 0.0
        %1616 = vmatprep.subr.mxu0 0.0
        %1617 = vmatpush1.msra.mxu0 0.0
        %1618 = vmatprep.subr.mxu0 0.0
        %1619 = vmatpush1.msra.mxu0 0.0
        %1620 = vmatprep.subr.mxu0 0.0
        %1621 = vmatpush1.msra.mxu0 0.0
        %1622 = vmatprep.subr.mxu0 0.0
        %1623 = vmatpush1.msra.mxu0 0.0
        %1624 = vmatprep.subr.mxu0 0.0
        %1625 = vmatpush1.msra.mxu0 0.0
        %1626 = vmatprep.mubr.f32.mxu0 0.0
        %1627 = vmatmul.mubr.f32.gmra.mrb[0].mxu0 %v1557
        %v1628 = vpop.f32.mrb[0].mxu0
        %v1629 = vadd.f32 %v1522, %v1628
        %v1630 = vpop.f32.mrb[0].mxu0
        %1631 = vmatprep.mubr.f32.mxu0 0.0
        %1632 = vmatmul.mubr.f32.gmra.mrb[0].mxu0 %v1560
        %v1633 = vpop.f32.mrb[0].mxu0
        %v1634 = vadd.f32 %v1522, %v1633
        %v1635 = vpop.f32.mrb[0].mxu0
        %1636 = vdwg.mxu0
        %1637 = vst.msk [vmem:[%s231] sm:$0xff] %vm329, %v1629
        %1638 = vst.msk [vmem:[%s231 + $0x8] sm:$0xff] %vm329, %v1634
        %s1639 = sand.u32 %s138, 1
        %s1640 = scalar_lea.sflag [#allocation4], %s1639
        %s1641 = sand.u32 %s138, 1
        %s1642 = smul.addr %s1641, 16
        %s1643 = scalar_lea.vmem [#allocation6], %s1642
        // Predicated region
        $region45: #{tpu_custom_call.1} parent=39 // pred_check
          %p1644 = pneg %p148
        $region46: #{tpu_custom_call.1} parent=39 // pred_check_branch
          %1646 = sbr.rel (%p1644) target = $region48
        $region47: #{tpu_custom_call.1} parent=39 // pred_region
          %s1648 = ssub.s32 256, 256
          %1649 = vsyncadd %s1640, %s1648
          %s1650 = smul.addr %s20, 2
          %s1651 = smul.addr %s1650, 128
          %s1652 = scalar_lea.hbm %s5, %s1651
          %s1653 = sshll.u32 %s1643, 4
          %s1654 = int_to_ptr.vmem [resolvable:$true] %s1653
          %1659 = dma.vmem_to_hbm [thread:$0]  %s1654, 256, %s1652, %s1640, 128, 128, 8
        $region48: #{tpu_custom_call.1} parent=39 // pred_fallthru
          _
      $region40: #{tpu_custom_call.1} parent=5 // pred_fallthru
        _
      %p1660 = scmp.le.s32.totalorder 2, %s15
      // Predicated region
      $region49: #{tpu_custom_call.1} parent=5 // pred_check
        %p1661 = pneg %p1660
      $region50: #{tpu_custom_call.1} parent=5 // pred_check_branch
        %1663 = sbr.rel (%p1661) target = $region52
      $region51: #{tpu_custom_call.1} parent=5 // pred_region
        %s1664 = ssub.s32 %s15, 2
        // Predicated region
        $region53: #{tpu_custom_call.1} parent=51 // pred_check
          %p1665 = pneg %p154
        $region54: #{tpu_custom_call.1} parent=51 // pred_check_branch
          %1667 = sbr.rel (%p1665) target = $region56
        $region55: #{tpu_custom_call.1} parent=51 // pred_region
          %s1668 = sand.u32 %s139, 1
          %s1669 = scalar_lea.sflag [#allocation4], %s1668
          %s1670 = sand.u32 %s139, 1
          %s1671 = smul.addr %s1670, 16
          %s1672 = scalar_lea.vmem [#allocation6], %s1671
          %1673 = dma.done %s1669, 256
        $region56: #{tpu_custom_call.1} parent=51 // pred_fallthru
          _
      $region52: #{tpu_custom_call.1} parent=5 // pred_fallthru
        _
    $region6: #{tpu_custom_call.1} parent=1 // loop_footer
      %s19 = sadd.s32 1, %s15
    $region7: #{tpu_custom_call.1} parent=1 // loop_footer_branch
      %14 = sbr.rel target = $region3
    $region8: #{tpu_custom_call.1} parent=1 // loop_exit
      _
    %1674 = vsyncpa [#allocation4], 1
    %s1675 = scalar_lea.sflag [#allocation4], 1
    %1676 = vsyncpa %s1675, 1
    %1677 = vsyncpa [#allocation5], 1
    %s1678 = scalar_lea.sflag [#allocation5], 1
    %1679 = vsyncpa %s1678, 1

</llo_original>
